<compile_context>
chip_gen: v5e
topology: v5e:2x2
jax: 0.10.0
libtpu: 0.0.40
codegen_flags: <defaults>
</compile_context>

<pallas_src>
import jax
import jax.numpy as jnp
from jax.experimental import pallas as pl
from jax.experimental.pallas import tpu as pltpu


# ---------------------------------------------------------------------------
# Pallas kernel: y = relu((x @ w) * scale + bias)
# ---------------------------------------------------------------------------
def _proj_bn_relu_kernel(x_ref, w_ref, s_ref, b_ref, o_ref):
    # Cast activations to bf16 in-register (VPU has slack; kernel is HBM-bound),
    # so the wrapper never materializes a bf16 activation copy in HBM.
    x = x_ref[...].astype(jnp.bfloat16)
    # (TM, Cin) @ (Cin, TN) on the MXU, f32 accumulate.
    y = jnp.dot(x, w_ref[...], preferred_element_type=jnp.float32)
    # Folded-BN affine + ReLU kept entirely in f32 vregs (v5e-safe epilogue).
    y = y * s_ref[...] + b_ref[...]
    o_ref[...] = jnp.maximum(y, 0.0).astype(o_ref.dtype)


def _vmem_capacity_bytes(default=64 << 20):
    # Conservative default (v7x-sized) if the query is unavailable.
    try:
        return int(pltpu.get_tpu_info().vmem_capacity_bytes)
    except Exception:
        return default


def _round_up(v, m):
    return -(-v // m) * m


def fused_proj_bn_relu(x2d, w, scale, bias, *, out_dtype=jnp.bfloat16):
    """Fused 1x1-conv (as matmul) + folded BatchNorm + ReLU."""
    m, cin = x2d.shape
    cin_w, cout = w.shape
    assert cin == cin_w, (cin, cin_w)

    # Weights / BN affine are tiny: cast once in the wrapper. Activations stay
    # in their native dtype (cast in-kernel).
    w = w.astype(jnp.bfloat16)
    scale = scale.reshape(1, cout).astype(jnp.float32)
    bias = bias.reshape(1, cout).astype(jnp.float32)

    x_bytes = jnp.dtype(x2d.dtype).itemsize
    out_bytes = jnp.dtype(out_dtype).itemsize
    vmem_cap = _vmem_capacity_bytes()

    # Cout tile: full width whenever the weight block is small (always for
    # FCUUp, cout <= 256) -> weights stay resident, 1-D grid, unmasked stores.
    tn = cout if cin * cout * 2 <= (8 << 20) else 256

    # Row tile: up to 1024 on 128-MiB-VMEM parts (v5e/v6e), 512 on v7x (64 MiB);
    # keep >= 2 row steps so both v7x TensorCores get work.
    tm_max = 1024 if vmem_cap >= (100 << 20) else 512
    if m <= tm_max:
        tm = _round_up(pl.cdiv(m, 2), 128)
        tm = m if tm >= m else min(tm, tm_max)
    else:
        tm = tm_max

    gm, gn = pl.cdiv(m, tm), pl.cdiv(cout, tn)

    if gn == 1:
        grid = (gm,)
        in_specs = [
            pl.BlockSpec((tm, cin), lambda i: (i, 0)),     # activation rows
            pl.BlockSpec((cin, cout), lambda i: (0, 0)),   # weights (resident)
            pl.BlockSpec((1, cout), lambda i: (0, 0)),     # folded BN scale
            pl.BlockSpec((1, cout), lambda i: (0, 0)),     # folded BN bias
        ]
        out_specs = pl.BlockSpec((tm, cout), lambda i: (i, 0))
        dims = ("parallel",)
    else:
        grid = (gm, gn)
        in_specs = [
            pl.BlockSpec((tm, cin), lambda i, j: (i, 0)),
            pl.BlockSpec((cin, tn), lambda i, j: (0, j)),
            pl.BlockSpec((1, tn), lambda i, j: (0, j)),
            pl.BlockSpec((1, tn), lambda i, j: (0, j)),
        ]
        out_specs = pl.BlockSpec((tm, tn), lambda i, j: (i, j))
        dims = ("parallel", "parallel")

    # Double-buffered per-step VMEM footprint; cap derived from hardware
    # (<= 0.75x physical VMEM, so valid on v7x's 64 MiB as well).
    buf_bytes = 2 * (tm * cin * x_bytes + cin * tn * 2 + 2 * tn * 4
                     + tm * tn * out_bytes)
    vmem_limit = int(min(int(0.75 * vmem_cap), max(32 << 20, 2 * buf_bytes)))

    w_reads = 1 if gn == 1 else gm   # weights stay resident on the 1-D grid
    cost = pl.CostEstimate(
        flops=2 * m * cin * cout,
        transcendentals=0,
        bytes_accessed=(m * cin * x_bytes + w_reads * cin * cout * 2
                        + 2 * cout * 4 + m * cout * out_bytes),
    )

    return pl.pallas_call(
        _proj_bn_relu_kernel,
        out_shape=jax.ShapeDtypeStruct((m, cout), out_dtype),
        grid=grid,
        in_specs=in_specs,
        out_specs=out_specs,
        compiler_params=pltpu.CompilerParams(
            dimension_semantics=dims,
            vmem_limit_bytes=vmem_limit,
        ),
        cost_estimate=cost,
    )(x2d, w, scale, bias)


# ---------------------------------------------------------------------------
# FCUUp forward (kernel does the compute; layout ops are XLA glue)
# ---------------------------------------------------------------------------
def fcu_up_forward(params, x, H, W, *, up_stride, out_dtype=jnp.bfloat16):
    B, S, C = x.shape
    assert S == H * W + 1, "FCUUp expects a leading cls token: S == H*W + 1"
    cout = params["w"].shape[1]

    # Metadata-only reshape of the contiguous (B, S, C) slab: all B*S rows
    # (cls rows included, they are noise) flow through the matmul and the cls
    # rows are dropped afterwards, where the slice fuses into the downstream
    # layout fusion.  Avoids materializing x[:, 1:].reshape(...) (an extra
    # full HBM pass over the activations).
    y = fused_proj_bn_relu(x.reshape(B * S, C), params["w"], params["scale"],
                           params["bias"], out_dtype=out_dtype)
    y = y.reshape(B, S, cout)[:, 1:, :].reshape(B, H, W, cout)

    # NCHW + nearest-neighbour upsample.  Pure layout ops: XLA fuses the
    # broadcast into the (mandatory) NCHW transpose -> one read-small/write-big op.
    # TODO(synk): if HLO ever shows a separate transpose copy here, switch the
    #             kernel to emit channel-major (cout, rows) tiles instead.
    y = jnp.transpose(y, (0, 3, 1, 2))                               # (B, Cout, H, W)
    y = jnp.broadcast_to(y[:, :, :, None, :, None],
                         (B, cout, H, up_stride, W, up_stride))
    return y.reshape(B, cout, H * up_stride, W * up_stride)


# ---------------------------------------------------------------------------
# Deterministic parameter init (conv bias + BN folded to scale/bias)
# ---------------------------------------------------------------------------
def init_params(key, inplanes, outplanes, eps=1e-6):
    k1, k2, k3, k4, k5, k6 = jax.random.split(key, 6)
    w = jax.random.normal(k1, (inplanes, outplanes), jnp.float32) / jnp.sqrt(
        float(inplanes))
    b_conv = 0.1 * jax.random.normal(k2, (outplanes,), jnp.float32)
    gamma = 1.0 + 0.1 * jax.random.normal(k3, (outplanes,), jnp.float32)
    beta = 0.1 * jax.random.normal(k4, (outplanes,), jnp.float32)
    mean = 0.1 * jax.random.normal(k5, (outplanes,), jnp.float32)
    var = 1.0 + 0.1 * jnp.abs(jax.random.normal(k6, (outplanes,), jnp.float32))
    scale = gamma * jax.lax.rsqrt(var + eps)
    bias = (b_conv - mean) * scale + beta
    return {"w": w, "scale": scale, "bias": bias}


# ---------------------------------------------------------------------------
# Pure-JAX reference (matches the kernel's bf16 operand rounding)
# ---------------------------------------------------------------------------
def reference_forward(params, x, H, W, *, up_stride):
    B, S, C = x.shape
    cout = params["w"].shape[1]
    x_tok = x[:, 1:, :].astype(jnp.bfloat16).astype(jnp.float32)
    w = params["w"].astype(jnp.bfloat16).astype(jnp.float32)
    y = jnp.einsum("btc,cd->btd", x_tok, w)
    y = jnp.maximum(y * params["scale"] + params["bias"], 0.0)
    y = jnp.transpose(y.reshape(B, H, W, cout), (0, 3, 1, 2))
    y = jnp.repeat(jnp.repeat(y, up_stride, axis=2), up_stride, axis=3)
    return y


if __name__ == "__main__":
    key = jax.random.PRNGKey(0)
    kx, kp = jax.random.split(key)

    B, H, W = 2, 16, 16
    inplanes, outplanes, up_stride = 128, 256, 2

    x = jax.random.normal(kx, (B, H * W + 1, inplanes), jnp.float32)
    params = init_params(kp, inplanes, outplanes)

    fwd = jax.jit(lambda p, xx: fcu_up_forward(p, xx, H, W, up_stride=up_stride))
    out = jax.block_until_ready(fwd(params, x))

    assert out.shape == (B, outplanes, H * up_stride, W * up_stride), out.shape

    ref = reference_forward(params, x, H, W, up_stride=up_stride)
    out_f32 = out.astype(jnp.float32)
    max_err = float(jnp.max(jnp.abs(out_f32 - ref)))
    assert jnp.allclose(out_f32, ref, atol=2e-2, rtol=2e-2), max_err

    print("KERNEL_OK")
</pallas_src>

<mosaic_0001>
module attributes {stable_mosaic.version = 11 : i64} {
  func.func @_proj_bn_relu_kernel(%arg0: i32, %arg1: memref<512x128xf32, #tpu.memory_space<vmem>>, %arg2: memref<128x256xbf16, #tpu.memory_space<vmem>>, %arg3: memref<1x256xf32, #tpu.memory_space<vmem>>, %arg4: memref<1x256xf32, #tpu.memory_space<vmem>>, %arg5: memref<512x256xbf16, #tpu.memory_space<vmem>>) attributes {dimension_semantics = [#tpu.dimension_semantics<parallel>], iteration_bounds = array<i64: 2>, scalar_prefetch = 0 : i64, scratch_operands = 0 : i64, tpu.core_type = #tpu.core_type<tc>, window_params = [{transform_indices = @transform_0, window_bounds = array<i64: 512, 128>}, {pipeline_mode = #tpu.pipeline_mode<synchronous>, transform_indices = @transform_1, window_bounds = array<i64: 128, 256>}, {pipeline_mode = #tpu.pipeline_mode<synchronous>, transform_indices = @transform_2, window_bounds = array<i64: 1, 256>}, {pipeline_mode = #tpu.pipeline_mode<synchronous>, transform_indices = @transform_3, window_bounds = array<i64: 1, 256>}, {transform_indices = @transform_4, window_bounds = array<i64: 512, 256>}]} {
    %c0 = arith.constant 0 : index
    %c0_0 = arith.constant 0 : index
    %0 = vector.load %arg1[%c0, %c0_0] : memref<512x128xf32, #tpu.memory_space<vmem>>, vector<512x128xf32>
    %1 = arith.truncf %0 : vector<512x128xf32> to vector<512x128xbf16>
    %c0_1 = arith.constant 0 : index
    %c0_2 = arith.constant 0 : index
    %2 = vector.load %arg2[%c0_1, %c0_2] : memref<128x256xbf16, #tpu.memory_space<vmem>>, vector<128x256xbf16>
    %cst = arith.constant dense<0.000000e+00> : vector<512x256xf32>
    %3 = tpu.matmul %1, %2, %cst {dimension_numbers = #tpu.dot_dimension_numbers<[1], [0], [0], [1], [0, 0, 1, 1], [], []>} : vector<512x128xbf16>, vector<128x256xbf16>, vector<512x256xf32> -> vector<512x256xf32>
    %c0_3 = arith.constant 0 : index
    %c0_4 = arith.constant 0 : index
    %4 = vector.load %arg3[%c0_3, %c0_4] : memref<1x256xf32, #tpu.memory_space<vmem>>, vector<1x256xf32>
    %5 = vector.broadcast %4 : vector<1x256xf32> to vector<512x256xf32>
    %6 = arith.mulf %3, %5 : vector<512x256xf32>
    %c0_5 = arith.constant 0 : index
    %c0_6 = arith.constant 0 : index
    %7 = vector.load %arg4[%c0_5, %c0_6] : memref<1x256xf32, #tpu.memory_space<vmem>>, vector<1x256xf32>
    %8 = vector.broadcast %7 : vector<1x256xf32> to vector<512x256xf32>
    %9 = arith.addf %6, %8 : vector<512x256xf32>
    %cst_7 = arith.constant 0.000000e+00 : f32
    %10 = vector.broadcast %cst_7 : f32 to vector<512x256xf32>
    %11 = arith.maximumf %9, %10 : vector<512x256xf32>
    %12 = arith.truncf %11 : vector<512x256xf32> to vector<512x256xbf16>
    %c0_8 = arith.constant 0 : index
    %c0_9 = arith.constant 0 : index
    %13 = vector.load %arg5[%c0_8, %c0_9] : memref<512x256xbf16, #tpu.memory_space<vmem>>, vector<512x256xbf16>
    tpu.vector_store %arg5[%c0_8, %c0_9], %12 {strides = array<i32>} : memref<512x256xbf16, #tpu.memory_space<vmem>>, vector<512x256xbf16>,
    return
  }
  func.func @transform_0(%arg0: i32) -> (i32, i32) {
    %c0_i32 = arith.constant 0 : i32
    %c0_i32_0 = arith.constant 0 : i32
    return %arg0, %c0_i32 : i32, i32
  }
  func.func @transform_1(%arg0: i32) -> (i32, i32) {
    %c0_i32 = arith.constant 0 : i32
    %c0_i32_0 = arith.constant 0 : i32
    %c0_i32_1 = arith.constant 0 : i32
    return %c0_i32, %c0_i32_0 : i32, i32
  }
  func.func @transform_2(%arg0: i32) -> (i32, i32) {
    %c0_i32 = arith.constant 0 : i32
    %c0_i32_0 = arith.constant 0 : i32
    %c0_i32_1 = arith.constant 0 : i32
    return %c0_i32, %c0_i32_0 : i32, i32
  }
  func.func @transform_3(%arg0: i32) -> (i32, i32) {
    %c0_i32 = arith.constant 0 : i32
    %c0_i32_0 = arith.constant 0 : i32
    %c0_i32_1 = arith.constant 0 : i32
    return %c0_i32, %c0_i32_0 : i32, i32
  }
  func.func @transform_4(%arg0: i32) -> (i32, i32) {
    %c0_i32 = arith.constant 0 : i32
    %c0_i32_0 = arith.constant 0 : i32
    return %arg0, %c0_i32 : i32, i32
  }
}

</mosaic_0001>

<llo_original>
// kernel: _lambda_.1
$region0: #{_lambda_.1}
  #allocation0 [shape = 'u32[]', space=smem, size = 0x4, offset = 0x4, fixed_abs, tag = 'smem constant byte address 0x4 - core index']
  #allocation1 [shape = 'u32[72,128]{1,0:T(1,128)}', space=vmem, size = 0x9000, scoped, tag = 'internal scratch']
  %s0 = inlined_call_operand.vmem [shape: f32[514,128], index: 0, kind: input, shape index: {}]
  %s1 = inlined_call_operand.vmem [shape: bf16[128,256], index: 1, kind: input, shape index: {}]
  %s2 = inlined_call_operand.vmem [shape: f32[1,256], index: 2, kind: input, shape index: {}]
  %s3 = inlined_call_operand.vmem [shape: f32[1,256], index: 3, kind: input, shape index: {}]
  %s4 = inlined_call_operand.vmem [shape: bf16[514,256], index: 4, kind: output, shape index: {}]
  %s5 = sld [smem:[#allocation0]]
  $region97: #{_lambda_.1} parent=0
    _
  %s7 = ssub.s32 1, %s5
  %s8 = scalar_select 0, %s7, %s5
  $region1: #{_lambda_.1} parent=0
    #allocation2 [shape = 'u8[524288]{0}', space=vmem, size = 0x80000, scoped, tag = 'output window, operand 0']
    loop: start=0, step=1, limit=4
    $region2: #{_lambda_.1} parent=1 // loop_pre_header
      _
    $region3: #{_lambda_.1} parent=1 // loop_header
      %s10 = sphi 0, %s14
      %p11 = scmp.ge.s32.totalorder %s10, 4
      %s20 = sphi 0, %s22
      %s23 = sphi 0, %s20
      %s24 = sphi 0, %s23
      %s40 = sphi 0, %s24
      %s44 = sphi 0, %s44
      %s46 = sphi 0, %s44
      %s47 = sphi 0, %s46
      %s61 = sphi 0, %s47
      %s65 = sphi 0, %s65
      %s67 = sphi 0, %s65
      %s68 = sphi 0, %s67
      %s82 = sphi 0, %s68
      %s86 = sphi 0, %s86
      %s88 = sphi 0, %s86
      %s89 = sphi 0, %s88
      %s103 = sphi 0, %s89
      %s109 = sphi 0, %s111
      %s112 = sphi 0, %s109
      %s113 = sphi 0, %s112
      %s129 = sphi 0, %s113
    $region4: #{_lambda_.1} parent=1 // loop_header_branch
      %13 = sbr.rel (%p11) target = $region8
    $region5: #{_lambda_.1} parent=1 // loop_body
      %s15 = ssub.s32 %s10, 1
      %s16 = ssub.s32 %s10, 2
      %s17 = sadd.s32 %s10, 1
      %s18 = ssub.s32 %s10, %s17
      %p19 = scmp.eq.s32.totalorder %s18, 0
      %s21 = sadd.s32 %s20, 1
      %s22 = scalar_select %p19, %s20, %s21
      %p25 = pneg %p19
      %p26 = scmp.eq.s32.totalorder %s10, 1
      %p27 = por %p25, %p26
      %p28 = scmp.ne.s32.totalorder %s20, %s23
      %p29 = scmp.eq.s32.totalorder %s10, 0
      %p30 = por %p28, %p29
      %p31 = scmp.ne.s32.totalorder %s20, %s23
      %p32 = scmp.eq.s32.totalorder %s15, 1
      %p33 = por %p31, %p32
      %p34 = scmp.ne.s32.totalorder %s23, %s24
      %p35 = scmp.eq.s32.totalorder %s15, 0
      %p36 = por %p34, %p35
      %p37 = scmp.ne.s32.totalorder %s23, %s24
      %p38 = scmp.eq.s32.totalorder %s16, 1
      %p39 = por %p37, %p38
      %p41 = scmp.ne.s32.totalorder %s24, %s40
      %p42 = scmp.eq.s32.totalorder %s16, 0
      %p43 = por %p41, %p42
      %s45 = sadd.s32 %s44, 1
      %p48 = scmp.eq.s32.totalorder %s10, 1
      %p49 = scmp.ne.s32.totalorder %s44, %s46
      %p50 = scmp.eq.s32.totalorder %s10, 0
      %p51 = por %p49, %p50
      %p52 = scmp.ne.s32.totalorder %s44, %s46
      %p53 = scmp.eq.s32.totalorder %s15, 1
      %p54 = por %p52, %p53
      %p55 = scmp.ne.s32.totalorder %s46, %s47
      %p56 = scmp.eq.s32.totalorder %s15, 0
      %p57 = por %p55, %p56
      %p58 = scmp.ne.s32.totalorder %s46, %s47
      %p59 = scmp.eq.s32.totalorder %s16, 1
      %p60 = por %p58, %p59
      %p62 = scmp.ne.s32.totalorder %s47, %s61
      %p63 = scmp.eq.s32.totalorder %s16, 0
      %p64 = por %p62, %p63
      %s66 = sadd.s32 %s65, 1
      %p69 = scmp.eq.s32.totalorder %s10, 1
      %p70 = scmp.ne.s32.totalorder %s65, %s67
      %p71 = scmp.eq.s32.totalorder %s10, 0
      %p72 = por %p70, %p71
      %p73 = scmp.ne.s32.totalorder %s65, %s67
      %p74 = scmp.eq.s32.totalorder %s15, 1
      %p75 = por %p73, %p74
      %p76 = scmp.ne.s32.totalorder %s67, %s68
      %p77 = scmp.eq.s32.totalorder %s15, 0
      %p78 = por %p76, %p77
      %p79 = scmp.ne.s32.totalorder %s67, %s68
      %p80 = scmp.eq.s32.totalorder %s16, 1
      %p81 = por %p79, %p80
      %p83 = scmp.ne.s32.totalorder %s68, %s82
      %p84 = scmp.eq.s32.totalorder %s16, 0
      %p85 = por %p83, %p84
      %s87 = sadd.s32 %s86, 1
      %p90 = scmp.eq.s32.totalorder %s10, 1
      %p91 = scmp.ne.s32.totalorder %s86, %s88
      %p92 = scmp.eq.s32.totalorder %s10, 0
      %p93 = por %p91, %p92
      %p94 = scmp.ne.s32.totalorder %s86, %s88
      %p95 = scmp.eq.s32.totalorder %s15, 1
      %p96 = por %p94, %p95
      %p97 = scmp.ne.s32.totalorder %s88, %s89
      %p98 = scmp.eq.s32.totalorder %s15, 0
      %p99 = por %p97, %p98
      %p100 = scmp.ne.s32.totalorder %s88, %s89
      %p101 = scmp.eq.s32.totalorder %s16, 1
      %p102 = por %p100, %p101
      %p104 = scmp.ne.s32.totalorder %s89, %s103
      %p105 = scmp.eq.s32.totalorder %s16, 0
      %p106 = por %p104, %p105
      %s107 = ssub.s32 %s10, %s17
      %p108 = scmp.eq.s32.totalorder %s107, 0
      %s110 = sadd.s32 %s109, 1
      %s111 = scalar_select %p108, %s109, %s110
      %p114 = pneg %p108
      %p115 = scmp.eq.s32.totalorder %s10, 1
      %p116 = por %p114, %p115
      %p117 = scmp.ne.s32.totalorder %s109, %s112
      %p118 = scmp.eq.s32.totalorder %s10, 0
      %p119 = por %p117, %p118
      %p120 = scmp.ne.s32.totalorder %s109, %s112
      %p121 = scmp.eq.s32.totalorder %s15, 1
      %p122 = por %p120, %p121
      %p123 = scmp.ne.s32.totalorder %s112, %s113
      %p124 = scmp.eq.s32.totalorder %s15, 0
      %p125 = por %p123, %p124
      %p126 = scmp.ne.s32.totalorder %s112, %s113
      %p127 = scmp.eq.s32.totalorder %s16, 1
      %p128 = por %p126, %p127
      %p130 = scmp.ne.s32.totalorder %s113, %s129
      %p131 = scmp.eq.s32.totalorder %s16, 0
      %p132 = por %p130, %p131
      %p133 = scmp.le.s32.totalorder 1, %s10
      %p134 = scmp.lt.s32.totalorder %s10, 3
      %p135 = pnand %p133, %p134
      %p136 = pneg %p135
      // Predicated region
      $region9: #{_lambda_.1} parent=5 // pred_check
        _
      $region10: #{_lambda_.1} parent=5 // pred_check_branch
        %138 = sbr.rel (%p135) target = $region12
      $region11: #{_lambda_.1} parent=5 // pred_region
        %s139 = ssub.s32 %s10, 1
        // Predicated region
        $region13: #{_lambda_.1} parent=11 // pred_check
          %p140 = pneg %p57
        $region14: #{_lambda_.1} parent=11 // pred_check_branch
          %142 = sbr.rel (%p140) target = $region16
        $region15: #{_lambda_.1} parent=11 // pred_region
          _
        $region16: #{_lambda_.1} parent=11 // pred_fallthru
          _
        // Predicated region
        $region17: #{_lambda_.1} parent=11 // pred_check
          %p143 = pneg %p78
        $region18: #{_lambda_.1} parent=11 // pred_check_branch
          %145 = sbr.rel (%p143) target = $region20
        $region19: #{_lambda_.1} parent=11 // pred_region
          _
        $region20: #{_lambda_.1} parent=11 // pred_fallthru
          _
        // Predicated region
        $region21: #{_lambda_.1} parent=11 // pred_check
          %p146 = pneg %p99
        $region22: #{_lambda_.1} parent=11 // pred_check_branch
          %148 = sbr.rel (%p146) target = $region24
        $region23: #{_lambda_.1} parent=11 // pred_region
          _
        $region24: #{_lambda_.1} parent=11 // pred_fallthru
          _
      $region12: #{_lambda_.1} parent=5 // pred_fallthru
        _
      %p149 = scmp.lt.s32.totalorder %s10, 2
      // Predicated region
      $region25: #{_lambda_.1} parent=5 // pred_check
        %p150 = pneg %p149
      $region26: #{_lambda_.1} parent=5 // pred_check_branch
        %152 = sbr.rel (%p150) target = $region28
      $region27: #{_lambda_.1} parent=5 // pred_region
        // Predicated region
        $region29: #{_lambda_.1} parent=27 // pred_check
          %p153 = pneg %p30
        $region30: #{_lambda_.1} parent=27 // pred_check_branch
          %155 = sbr.rel (%p153) target = $region32
        $region31: #{_lambda_.1} parent=27 // pred_region
          %s156 = smul.u32 64, %s10
          %s157 = ssub.s32 65, %s156
          %p158 = scmp.lt.s32.totalorder %s157, 64
          %s159 = scalar_select %p158, %s157, 64
          %s160 = smul.u32 8, %s159
          %p161 = scmp.lt.s32.totalorder %s156, 64
          %s162 = scalar_select %p161, %s156, 64
          %s163 = smul.addr %s162, 8
          %s164 = scalar_lea.vmem %s0, %s163
          %s165 = smul.u32 64, %s10
          %s166 = ssub.s32 65, %s165
          %p167 = scmp.lt.s32.totalorder %s166, 64
          %s168 = scalar_select %p167, %s166, 64
          %s169 = smul.u32 8, %s168
        $region32: #{_lambda_.1} parent=27 // pred_fallthru
          _
      $region28: #{_lambda_.1} parent=5 // pred_fallthru
        _
      %p170 = scmp.le.s32.totalorder 1, %s10
      %p171 = scmp.lt.s32.totalorder %s10, 3
      %p172 = pnand %p170, %p171
      %p173 = pneg %p172
      // Predicated region
      $region33: #{_lambda_.1} parent=5 // pred_check
        _
      $region34: #{_lambda_.1} parent=5 // pred_check_branch
        %175 = sbr.rel (%p172) target = $region36
      $region35: #{_lambda_.1} parent=5 // pred_region
        %s176 = ssub.s32 %s10, 1
        %s177 = smul.u32 64, %s15
        %s178 = ssub.s32 65, %s177
        %p179 = scmp.lt.s32.totalorder %s178, 64
        %s180 = scalar_select %p179, %s178, 64
        %s181 = smul.u32 8, %s180
        %p182 = scmp.lt.s32.totalorder %s177, 64
        %s183 = scalar_select %p182, %s177, 64
        %s184 = smul.addr %s183, 8
        %s185 = scalar_lea.vmem %s0, %s184
        %p186 = pneg %p36
        %p187 = pneg %p33
        %p188 = pneg %p57
        %p189 = pneg %p54
        %p190 = pneg %p78
        %p191 = pneg %p75
        %p192 = pneg %p99
        %p193 = pneg %p96
        %p194 = pneg %p125
        %p195 = pneg %p122
        %s196 = sand.u32 %s112, 1
        %s197 = sand.u32 %s112, 1
        %s198 = smul.addr %s197, 512
        %s199 = scalar_lea.vmem [#allocation2], %s198
        %s200 = smul.u32 64, %s15
        %s201 = ssub.s32 65, %s200
        %p202 = scmp.lt.s32.totalorder %s201, 64
        %s203 = scalar_select %p202, %s201, 64
        %s204 = smul.u32 8, %s203
        %p205 = scmp.lt.s32.totalorder %s200, 64
        %s206 = scalar_select %p205, %s200, 64
        %s207 = smul.addr %s206, 8
        %s208 = scalar_lea.vmem %s0, %s207
        %s209 = smul.u32 64, %s15
        %s210 = ssub.s32 65, %s209
        %p211 = scmp.lt.s32.totalorder %s210, 64
        %s212 = scalar_select %p211, %s210, 64
        %s213 = smul.u32 8, %s212
        %s214 = smul.u32 64, %s15
        %s215 = ssub.s32 65, %s214
        %p216 = scmp.lt.s32.totalorder %s215, 64
        %s217 = scalar_select %p216, %s215, 64
        %s218 = smul.u32 4, %s217
        %s219 = smul.u32 %s218, 2
        %v220 = vld [vmem:[%s208] sm:$0xff]
        %v221 = vld [vmem:[%s208 + $0x8] sm:$0xff]
        %v222 = vld [vmem:[%s208 + $0x10] sm:$0xff]
        %v223 = vld [vmem:[%s208 + $0x18] sm:$0xff]
        %v224 = vld [vmem:[%s208 + $0x20] sm:$0xff]
        %v225 = vld [vmem:[%s208 + $0x28] sm:$0xff]
        %v226 = vld [vmem:[%s208 + $0x30] sm:$0xff]
        %v227 = vld [vmem:[%s208 + $0x38] sm:$0xff]
        %v228 = vld [vmem:[%s208 + $0x40] sm:$0xff]
        %v229 = vld [vmem:[%s208 + $0x48] sm:$0xff]
        %v230 = vld [vmem:[%s208 + $0x50] sm:$0xff]
        %v231 = vld [vmem:[%s208 + $0x58] sm:$0xff]
        %v232 = vld [vmem:[%s208 + $0x60] sm:$0xff]
        %v233 = vld [vmem:[%s208 + $0x68] sm:$0xff]
        %v234 = vld [vmem:[%s208 + $0x70] sm:$0xff]
        %v235 = vld [vmem:[%s208 + $0x78] sm:$0xff]
        %v236 = vld [vmem:[%s208 + $0x80] sm:$0xff]
        %v237 = vld [vmem:[%s208 + $0x88] sm:$0xff]
        %v238 = vld [vmem:[%s208 + $0x90] sm:$0xff]
        %v239 = vld [vmem:[%s208 + $0x98] sm:$0xff]
        %v240 = vld [vmem:[%s208 + $0xa0] sm:$0xff]
        %v241 = vld [vmem:[%s208 + $0xa8] sm:$0xff]
        %v242 = vld [vmem:[%s208 + $0xb0] sm:$0xff]
        %v243 = vld [vmem:[%s208 + $0xb8] sm:$0xff]
        %v244 = vld [vmem:[%s208 + $0xc0] sm:$0xff]
        %v245 = vld [vmem:[%s208 + $0xc8] sm:$0xff]
        %v246 = vld [vmem:[%s208 + $0xd0] sm:$0xff]
        %v247 = vld [vmem:[%s208 + $0xd8] sm:$0xff]
        %v248 = vld [vmem:[%s208 + $0xe0] sm:$0xff]
        %v249 = vld [vmem:[%s208 + $0xe8] sm:$0xff]
        %v250 = vld [vmem:[%s208 + $0xf0] sm:$0xff]
        %v251 = vld [vmem:[%s208 + $0xf8] sm:$0xff]
        %v252 = vld [vmem:[%s208 + $0x100] sm:$0xff]
        %v253 = vld [vmem:[%s208 + $0x108] sm:$0xff]
        %v254 = vld [vmem:[%s208 + $0x110] sm:$0xff]
        %v255 = vld [vmem:[%s208 + $0x118] sm:$0xff]
        %v256 = vld [vmem:[%s208 + $0x120] sm:$0xff]
        %v257 = vld [vmem:[%s208 + $0x128] sm:$0xff]
        %v258 = vld [vmem:[%s208 + $0x130] sm:$0xff]
        %v259 = vld [vmem:[%s208 + $0x138] sm:$0xff]
        %v260 = vld [vmem:[%s208 + $0x140] sm:$0xff]
        %v261 = vld [vmem:[%s208 + $0x148] sm:$0xff]
        %v262 = vld [vmem:[%s208 + $0x150] sm:$0xff]
        %v263 = vld [vmem:[%s208 + $0x158] sm:$0xff]
        %v264 = vld [vmem:[%s208 + $0x160] sm:$0xff]
        %v265 = vld [vmem:[%s208 + $0x168] sm:$0xff]
        %v266 = vld [vmem:[%s208 + $0x170] sm:$0xff]
        %v267 = vld [vmem:[%s208 + $0x178] sm:$0xff]
        %v268 = vld [vmem:[%s208 + $0x180] sm:$0xff]
        %v269 = vld [vmem:[%s208 + $0x188] sm:$0xff]
        %v270 = vld [vmem:[%s208 + $0x190] sm:$0xff]
        %v271 = vld [vmem:[%s208 + $0x198] sm:$0xff]
        %v272 = vld [vmem:[%s208 + $0x1a0] sm:$0xff]
        %v273 = vld [vmem:[%s208 + $0x1a8] sm:$0xff]
        %v274 = vld [vmem:[%s208 + $0x1b0] sm:$0xff]
        %v275 = vld [vmem:[%s208 + $0x1b8] sm:$0xff]
        %v276 = vld [vmem:[%s208 + $0x1c0] sm:$0xff]
        %v277 = vld [vmem:[%s208 + $0x1c8] sm:$0xff]
        %v278 = vld [vmem:[%s208 + $0x1d0] sm:$0xff]
        %v279 = vld [vmem:[%s208 + $0x1d8] sm:$0xff]
        %v280 = vld [vmem:[%s208 + $0x1e0] sm:$0xff]
        %v281 = vld [vmem:[%s208 + $0x1e8] sm:$0xff]
        %v282 = vld [vmem:[%s208 + $0x1f0] sm:$0xff]
        %v283 = vld [vmem:[%s208 + $0x1f8] sm:$0xff]
        %v284 = vpack.c.bf16 %v221, %v220
        %v285 = vpack.c.bf16 %v223, %v222
        %v286 = vpack.c.bf16 %v225, %v224
        %v287 = vpack.c.bf16 %v227, %v226
        %v288 = vpack.c.bf16 %v229, %v228
        %v289 = vpack.c.bf16 %v231, %v230
        %v290 = vpack.c.bf16 %v233, %v232
        %v291 = vpack.c.bf16 %v235, %v234
        %v292 = vpack.c.bf16 %v237, %v236
        %v293 = vpack.c.bf16 %v239, %v238
        %v294 = vpack.c.bf16 %v241, %v240
        %v295 = vpack.c.bf16 %v243, %v242
        %v296 = vpack.c.bf16 %v245, %v244
        %v297 = vpack.c.bf16 %v247, %v246
        %v298 = vpack.c.bf16 %v249, %v248
        %v299 = vpack.c.bf16 %v251, %v250
        %v300 = vpack.c.bf16 %v253, %v252
        %v301 = vpack.c.bf16 %v255, %v254
        %v302 = vpack.c.bf16 %v257, %v256
        %v303 = vpack.c.bf16 %v259, %v258
        %v304 = vpack.c.bf16 %v261, %v260
        %v305 = vpack.c.bf16 %v263, %v262
        %v306 = vpack.c.bf16 %v265, %v264
        %v307 = vpack.c.bf16 %v267, %v266
        %v308 = vpack.c.bf16 %v269, %v268
        %v309 = vpack.c.bf16 %v271, %v270
        %v310 = vpack.c.bf16 %v273, %v272
        %v311 = vpack.c.bf16 %v275, %v274
        %v312 = vpack.c.bf16 %v277, %v276
        %v313 = vpack.c.bf16 %v279, %v278
        %v314 = vpack.c.bf16 %v281, %v280
        %v315 = vpack.c.bf16 %v283, %v282
        %v316 = vld [vmem:[%s1] sm:$0xff]
        %v317 = vld [vmem:[%s1 + $0x8] sm:$0xff]
        %v318 = vld [vmem:[%s1 + $0x10] sm:$0xff]
        %v319 = vld [vmem:[%s1 + $0x18] sm:$0xff]
        %v320 = vld [vmem:[%s1 + $0x20] sm:$0xff]
        %v321 = vld [vmem:[%s1 + $0x28] sm:$0xff]
        %v322 = vld [vmem:[%s1 + $0x30] sm:$0xff]
        %v323 = vld [vmem:[%s1 + $0x38] sm:$0xff]
        %v324 = vld [vmem:[%s1 + $0x40] sm:$0xff]
        %v325 = vld [vmem:[%s1 + $0x48] sm:$0xff]
        %v326 = vld [vmem:[%s1 + $0x50] sm:$0xff]
        %v327 = vld [vmem:[%s1 + $0x58] sm:$0xff]
        %v328 = vld [vmem:[%s1 + $0x60] sm:$0xff]
        %v329 = vld [vmem:[%s1 + $0x68] sm:$0xff]
        %v330 = vld [vmem:[%s1 + $0x70] sm:$0xff]
        %v331 = vld [vmem:[%s1 + $0x78] sm:$0xff]
        %v348 = vunpack.c.l.b16 %v316
        %v349 = vunpack.c.h.b16 %v316
        %v350 = vunpack.c.l.b16 %v317
        %v351 = vunpack.c.h.b16 %v317
        %v352 = vunpack.c.l.b16 %v318
        %v353 = vunpack.c.h.b16 %v318
        %v354 = vunpack.c.l.b16 %v319
        %v355 = vunpack.c.h.b16 %v319
        %v356 = vunpack.c.l.b16 %v320
        %v357 = vunpack.c.h.b16 %v320
        %v358 = vunpack.c.l.b16 %v321
        %v359 = vunpack.c.h.b16 %v321
        %v360 = vunpack.c.l.b16 %v322
        %v361 = vunpack.c.h.b16 %v322
        %v362 = vunpack.c.l.b16 %v323
        %v363 = vunpack.c.h.b16 %v323
        %v364 = vunpack.c.l.b16 %v324
        %v365 = vunpack.c.h.b16 %v324
        %v366 = vunpack.c.l.b16 %v325
        %v367 = vunpack.c.h.b16 %v325
        %v368 = vunpack.c.l.b16 %v326
        %v369 = vunpack.c.h.b16 %v326
        %v370 = vunpack.c.l.b16 %v327
        %v371 = vunpack.c.h.b16 %v327
        %v372 = vunpack.c.l.b16 %v328
        %v373 = vunpack.c.h.b16 %v328
        %v374 = vunpack.c.l.b16 %v329
        %v375 = vunpack.c.h.b16 %v329
        %v376 = vunpack.c.l.b16 %v330
        %v377 = vunpack.c.h.b16 %v330
        %v378 = vunpack.c.l.b16 %v331
        %v379 = vunpack.c.h.b16 %v331
        %v380 = vpack.c.b16 %v350, %v348
        %v381 = vpack.c.b16 %v351, %v349
        %v382 = vpack.c.b16 %v354, %v352
        %v383 = vpack.c.b16 %v355, %v353
        %v384 = vpack.c.b16 %v358, %v356
        %v385 = vpack.c.b16 %v359, %v357
        %v386 = vpack.c.b16 %v362, %v360
        %v387 = vpack.c.b16 %v363, %v361
        %v388 = vpack.c.b16 %v366, %v364
        %v389 = vpack.c.b16 %v367, %v365
        %v390 = vpack.c.b16 %v370, %v368
        %v391 = vpack.c.b16 %v371, %v369
        %v392 = vpack.c.b16 %v374, %v372
        %v393 = vpack.c.b16 %v375, %v373
        %v394 = vpack.c.b16 %v378, %v376
        %v395 = vpack.c.b16 %v379, %v377
        %412 = vmatpush.bf16.msra.mxu0 %v394
        %413 = vmatpush.bf16.msra.mxu0 %v392
        %414 = vmatpush.bf16.msra.mxu0 %v390
        %415 = vmatpush.bf16.msra.mxu0 %v388
        %416 = vmatpush.bf16.msra.mxu0 %v386
        %417 = vmatpush.bf16.msra.mxu0 %v384
        %418 = vmatpush.bf16.msra.mxu0 %v382
        %419 = vmatpush.bf16.msra.mxu0 %v380
        %420 = vmatmul.bf16.gmra.mxu0 %v284
        %v421 = vpop.f32.mrf.mxu0
        %v422 = vadd.f32 0.0, %v421
        %v423 = vpop.f32.mrf.mxu0
        %v424 = vadd.f32 0.0, %v423
        %425 = vmatmul.bf16.gmra.mxu0 %v285
        %v426 = vpop.f32.mrf.mxu0
        %v427 = vadd.f32 0.0, %v426
        %v428 = vpop.f32.mrf.mxu0
        %v429 = vadd.f32 0.0, %v428
        %430 = vmatmul.bf16.gmra.mxu0 %v286
        %v431 = vpop.f32.mrf.mxu0
        %v432 = vadd.f32 0.0, %v431
        %v433 = vpop.f32.mrf.mxu0
        %v434 = vadd.f32 0.0, %v433
        %435 = vmatmul.bf16.gmra.mxu0 %v287
        %v436 = vpop.f32.mrf.mxu0
        %v437 = vadd.f32 0.0, %v436
        %v438 = vpop.f32.mrf.mxu0
        %v439 = vadd.f32 0.0, %v438
        %440 = vmatmul.bf16.gmra.mxu0 %v288
        %v441 = vpop.f32.mrf.mxu0
        %v442 = vadd.f32 0.0, %v441
        %v443 = vpop.f32.mrf.mxu0
        %v444 = vadd.f32 0.0, %v443
        %445 = vmatmul.bf16.gmra.mxu0 %v289
        %v446 = vpop.f32.mrf.mxu0
        %v447 = vadd.f32 0.0, %v446
        %v448 = vpop.f32.mrf.mxu0
        %v449 = vadd.f32 0.0, %v448
        %450 = vmatmul.bf16.gmra.mxu0 %v290
        %v451 = vpop.f32.mrf.mxu0
        %v452 = vadd.f32 0.0, %v451
        %v453 = vpop.f32.mrf.mxu0
        %v454 = vadd.f32 0.0, %v453
        %455 = vmatmul.bf16.gmra.mxu0 %v291
        %v456 = vpop.f32.mrf.mxu0
        %v457 = vadd.f32 0.0, %v456
        %v458 = vpop.f32.mrf.mxu0
        %v459 = vadd.f32 0.0, %v458
        %460 = vmatmul.bf16.gmra.mxu0 %v292
        %v461 = vpop.f32.mrf.mxu0
        %v462 = vadd.f32 0.0, %v461
        %v463 = vpop.f32.mrf.mxu0
        %v464 = vadd.f32 0.0, %v463
        %465 = vmatmul.bf16.gmra.mxu0 %v293
        %v466 = vpop.f32.mrf.mxu0
        %v467 = vadd.f32 0.0, %v466
        %v468 = vpop.f32.mrf.mxu0
        %v469 = vadd.f32 0.0, %v468
        %470 = vmatmul.bf16.gmra.mxu0 %v294
        %v471 = vpop.f32.mrf.mxu0
        %v472 = vadd.f32 0.0, %v471
        %v473 = vpop.f32.mrf.mxu0
        %v474 = vadd.f32 0.0, %v473
        %475 = vmatmul.bf16.gmra.mxu0 %v295
        %v476 = vpop.f32.mrf.mxu0
        %v477 = vadd.f32 0.0, %v476
        %v478 = vpop.f32.mrf.mxu0
        %v479 = vadd.f32 0.0, %v478
        %480 = vmatmul.bf16.gmra.mxu0 %v296
        %v481 = vpop.f32.mrf.mxu0
        %v482 = vadd.f32 0.0, %v481
        %v483 = vpop.f32.mrf.mxu0
        %v484 = vadd.f32 0.0, %v483
        %485 = vmatmul.bf16.gmra.mxu0 %v297
        %v486 = vpop.f32.mrf.mxu0
        %v487 = vadd.f32 0.0, %v486
        %v488 = vpop.f32.mrf.mxu0
        %v489 = vadd.f32 0.0, %v488
        %490 = vmatmul.bf16.gmra.mxu0 %v298
        %v491 = vpop.f32.mrf.mxu0
        %v492 = vadd.f32 0.0, %v491
        %v493 = vpop.f32.mrf.mxu0
        %v494 = vadd.f32 0.0, %v493
        %495 = vmatmul.bf16.gmra.mxu0 %v299
        %v496 = vpop.f32.mrf.mxu0
        %v497 = vadd.f32 0.0, %v496
        %v498 = vpop.f32.mrf.mxu0
        %v499 = vadd.f32 0.0, %v498
        %500 = vmatmul.bf16.gmra.mxu0 %v300
        %v501 = vpop.f32.mrf.mxu0
        %v502 = vadd.f32 0.0, %v501
        %v503 = vpop.f32.mrf.mxu0
        %v504 = vadd.f32 0.0, %v503
        %505 = vmatmul.bf16.gmra.mxu0 %v301
        %v506 = vpop.f32.mrf.mxu0
        %v507 = vadd.f32 0.0, %v506
        %v508 = vpop.f32.mrf.mxu0
        %v509 = vadd.f32 0.0, %v508
        %510 = vmatmul.bf16.gmra.mxu0 %v302
        %v511 = vpop.f32.mrf.mxu0
        %v512 = vadd.f32 0.0, %v511
        %v513 = vpop.f32.mrf.mxu0
        %v514 = vadd.f32 0.0, %v513
        %515 = vmatmul.bf16.gmra.mxu0 %v303
        %v516 = vpop.f32.mrf.mxu0
        %v517 = vadd.f32 0.0, %v516
        %v518 = vpop.f32.mrf.mxu0
        %v519 = vadd.f32 0.0, %v518
        %520 = vmatmul.bf16.gmra.mxu0 %v304
        %v521 = vpop.f32.mrf.mxu0
        %v522 = vadd.f32 0.0, %v521
        %v523 = vpop.f32.mrf.mxu0
        %v524 = vadd.f32 0.0, %v523
        %525 = vmatmul.bf16.gmra.mxu0 %v305
        %v526 = vpop.f32.mrf.mxu0
        %v527 = vadd.f32 0.0, %v526
        %v528 = vpop.f32.mrf.mxu0
        %v529 = vadd.f32 0.0, %v528
        %530 = vmatmul.bf16.gmra.mxu0 %v306
        %v531 = vpop.f32.mrf.mxu0
        %v532 = vadd.f32 0.0, %v531
        %v533 = vpop.f32.mrf.mxu0
        %v534 = vadd.f32 0.0, %v533
        %535 = vmatmul.bf16.gmra.mxu0 %v307
        %v536 = vpop.f32.mrf.mxu0
        %v537 = vadd.f32 0.0, %v536
        %v538 = vpop.f32.mrf.mxu0
        %v539 = vadd.f32 0.0, %v538
        %540 = vmatmul.bf16.gmra.mxu0 %v308
        %v541 = vpop.f32.mrf.mxu0
        %v542 = vadd.f32 0.0, %v541
        %v543 = vpop.f32.mrf.mxu0
        %v544 = vadd.f32 0.0, %v543
        %545 = vmatmul.bf16.gmra.mxu0 %v309
        %v546 = vpop.f32.mrf.mxu0
        %v547 = vadd.f32 0.0, %v546
        %v548 = vpop.f32.mrf.mxu0
        %v549 = vadd.f32 0.0, %v548
        %550 = vmatmul.bf16.gmra.mxu0 %v310
        %v551 = vpop.f32.mrf.mxu0
        %v552 = vadd.f32 0.0, %v551
        %v553 = vpop.f32.mrf.mxu0
        %v554 = vadd.f32 0.0, %v553
        %555 = vmatmul.bf16.gmra.mxu0 %v311
        %v556 = vpop.f32.mrf.mxu0
        %v557 = vadd.f32 0.0, %v556
        %v558 = vpop.f32.mrf.mxu0
        %v559 = vadd.f32 0.0, %v558
        %560 = vmatmul.bf16.gmra.mxu0 %v312
        %v561 = vpop.f32.mrf.mxu0
        %v562 = vadd.f32 0.0, %v561
        %v563 = vpop.f32.mrf.mxu0
        %v564 = vadd.f32 0.0, %v563
        %565 = vmatmul.bf16.gmra.mxu0 %v313
        %v566 = vpop.f32.mrf.mxu0
        %v567 = vadd.f32 0.0, %v566
        %v568 = vpop.f32.mrf.mxu0
        %v569 = vadd.f32 0.0, %v568
        %570 = vmatmul.bf16.gmra.mxu0 %v314
        %v571 = vpop.f32.mrf.mxu0
        %v572 = vadd.f32 0.0, %v571
        %v573 = vpop.f32.mrf.mxu0
        %v574 = vadd.f32 0.0, %v573
        %575 = vmatmul.bf16.gmra.mxu0 %v315
        %v576 = vpop.f32.mrf.mxu0
        %v577 = vadd.f32 0.0, %v576
        %v578 = vpop.f32.mrf.mxu0
        %v579 = vadd.f32 0.0, %v578
        %580 = vdwg.mxu0
        %581 = vmatpush.bf16.msra.mxu0 %v395
        %582 = vmatpush.bf16.msra.mxu0 %v393
        %583 = vmatpush.bf16.msra.mxu0 %v391
        %584 = vmatpush.bf16.msra.mxu0 %v389
        %585 = vmatpush.bf16.msra.mxu0 %v387
        %586 = vmatpush.bf16.msra.mxu0 %v385
        %587 = vmatpush.bf16.msra.mxu0 %v383
        %588 = vmatpush.bf16.msra.mxu0 %v381
        %589 = vmatmul.bf16.gmra.mxu0 %v284
        %v590 = vpop.f32.mrf.mxu0
        %v591 = vadd.f32 0.0, %v590
        %v592 = vpop.f32.mrf.mxu0
        %v593 = vadd.f32 0.0, %v592
        %594 = vmatmul.bf16.gmra.mxu0 %v285
        %v595 = vpop.f32.mrf.mxu0
        %v596 = vadd.f32 0.0, %v595
        %v597 = vpop.f32.mrf.mxu0
        %v598 = vadd.f32 0.0, %v597
        %599 = vmatmul.bf16.gmra.mxu0 %v286
        %v600 = vpop.f32.mrf.mxu0
        %v601 = vadd.f32 0.0, %v600
        %v602 = vpop.f32.mrf.mxu0
        %v603 = vadd.f32 0.0, %v602
        %604 = vmatmul.bf16.gmra.mxu0 %v287
        %v605 = vpop.f32.mrf.mxu0
        %v606 = vadd.f32 0.0, %v605
        %v607 = vpop.f32.mrf.mxu0
        %v608 = vadd.f32 0.0, %v607
        %609 = vmatmul.bf16.gmra.mxu0 %v288
        %v610 = vpop.f32.mrf.mxu0
        %v611 = vadd.f32 0.0, %v610
        %v612 = vpop.f32.mrf.mxu0
        %v613 = vadd.f32 0.0, %v612
        %614 = vmatmul.bf16.gmra.mxu0 %v289
        %v615 = vpop.f32.mrf.mxu0
        %v616 = vadd.f32 0.0, %v615
        %v617 = vpop.f32.mrf.mxu0
        %v618 = vadd.f32 0.0, %v617
        %619 = vmatmul.bf16.gmra.mxu0 %v290
        %v620 = vpop.f32.mrf.mxu0
        %v621 = vadd.f32 0.0, %v620
        %v622 = vpop.f32.mrf.mxu0
        %v623 = vadd.f32 0.0, %v622
        %624 = vmatmul.bf16.gmra.mxu0 %v291
        %v625 = vpop.f32.mrf.mxu0
        %v626 = vadd.f32 0.0, %v625
        %v627 = vpop.f32.mrf.mxu0
        %v628 = vadd.f32 0.0, %v627
        %629 = vmatmul.bf16.gmra.mxu0 %v292
        %v630 = vpop.f32.mrf.mxu0
        %v631 = vadd.f32 0.0, %v630
        %v632 = vpop.f32.mrf.mxu0
        %v633 = vadd.f32 0.0, %v632
        %634 = vmatmul.bf16.gmra.mxu0 %v293
        %v635 = vpop.f32.mrf.mxu0
        %v636 = vadd.f32 0.0, %v635
        %v637 = vpop.f32.mrf.mxu0
        %v638 = vadd.f32 0.0, %v637
        %639 = vmatmul.bf16.gmra.mxu0 %v294
        %v640 = vpop.f32.mrf.mxu0
        %v641 = vadd.f32 0.0, %v640
        %v642 = vpop.f32.mrf.mxu0
        %v643 = vadd.f32 0.0, %v642
        %644 = vmatmul.bf16.gmra.mxu0 %v295
        %v645 = vpop.f32.mrf.mxu0
        %v646 = vadd.f32 0.0, %v645
        %v647 = vpop.f32.mrf.mxu0
        %v648 = vadd.f32 0.0, %v647
        %649 = vmatmul.bf16.gmra.mxu0 %v296
        %v650 = vpop.f32.mrf.mxu0
        %v651 = vadd.f32 0.0, %v650
        %v652 = vpop.f32.mrf.mxu0
        %v653 = vadd.f32 0.0, %v652
        %654 = vmatmul.bf16.gmra.mxu0 %v297
        %v655 = vpop.f32.mrf.mxu0
        %v656 = vadd.f32 0.0, %v655
        %v657 = vpop.f32.mrf.mxu0
        %v658 = vadd.f32 0.0, %v657
        %659 = vmatmul.bf16.gmra.mxu0 %v298
        %v660 = vpop.f32.mrf.mxu0
        %v661 = vadd.f32 0.0, %v660
        %v662 = vpop.f32.mrf.mxu0
        %v663 = vadd.f32 0.0, %v662
        %664 = vmatmul.bf16.gmra.mxu0 %v299
        %v665 = vpop.f32.mrf.mxu0
        %v666 = vadd.f32 0.0, %v665
        %v667 = vpop.f32.mrf.mxu0
        %v668 = vadd.f32 0.0, %v667
        %669 = vmatmul.bf16.gmra.mxu0 %v300
        %v670 = vpop.f32.mrf.mxu0
        %v671 = vadd.f32 0.0, %v670
        %v672 = vpop.f32.mrf.mxu0
        %v673 = vadd.f32 0.0, %v672
        %674 = vmatmul.bf16.gmra.mxu0 %v301
        %v675 = vpop.f32.mrf.mxu0
        %v676 = vadd.f32 0.0, %v675
        %v677 = vpop.f32.mrf.mxu0
        %v678 = vadd.f32 0.0, %v677
        %679 = vmatmul.bf16.gmra.mxu0 %v302
        %v680 = vpop.f32.mrf.mxu0
        %v681 = vadd.f32 0.0, %v680
        %v682 = vpop.f32.mrf.mxu0
        %v683 = vadd.f32 0.0, %v682
        %684 = vmatmul.bf16.gmra.mxu0 %v303
        %v685 = vpop.f32.mrf.mxu0
        %v686 = vadd.f32 0.0, %v685
        %v687 = vpop.f32.mrf.mxu0
        %v688 = vadd.f32 0.0, %v687
        %689 = vmatmul.bf16.gmra.mxu0 %v304
        %v690 = vpop.f32.mrf.mxu0
        %v691 = vadd.f32 0.0, %v690
        %v692 = vpop.f32.mrf.mxu0
        %v693 = vadd.f32 0.0, %v692
        %694 = vmatmul.bf16.gmra.mxu0 %v305
        %v695 = vpop.f32.mrf.mxu0
        %v696 = vadd.f32 0.0, %v695
        %v697 = vpop.f32.mrf.mxu0
        %v698 = vadd.f32 0.0, %v697
        %699 = vmatmul.bf16.gmra.mxu0 %v306
        %v700 = vpop.f32.mrf.mxu0
        %v701 = vadd.f32 0.0, %v700
        %v702 = vpop.f32.mrf.mxu0
        %v703 = vadd.f32 0.0, %v702
        %704 = vmatmul.bf16.gmra.mxu0 %v307
        %v705 = vpop.f32.mrf.mxu0
        %v706 = vadd.f32 0.0, %v705
        %v707 = vpop.f32.mrf.mxu0
        %v708 = vadd.f32 0.0, %v707
        %709 = vmatmul.bf16.gmra.mxu0 %v308
        %v710 = vpop.f32.mrf.mxu0
        %v711 = vadd.f32 0.0, %v710
        %v712 = vpop.f32.mrf.mxu0
        %v713 = vadd.f32 0.0, %v712
        %714 = vmatmul.bf16.gmra.mxu0 %v309
        %v715 = vpop.f32.mrf.mxu0
        %v716 = vadd.f32 0.0, %v715
        %v717 = vpop.f32.mrf.mxu0
        %v718 = vadd.f32 0.0, %v717
        %719 = vmatmul.bf16.gmra.mxu0 %v310
        %v720 = vpop.f32.mrf.mxu0
        %v721 = vadd.f32 0.0, %v720
        %v722 = vpop.f32.mrf.mxu0
        %v723 = vadd.f32 0.0, %v722
        %724 = vmatmul.bf16.gmra.mxu0 %v311
        %v725 = vpop.f32.mrf.mxu0
        %v726 = vadd.f32 0.0, %v725
        %v727 = vpop.f32.mrf.mxu0
        %v728 = vadd.f32 0.0, %v727
        %729 = vmatmul.bf16.gmra.mxu0 %v312
        %v730 = vpop.f32.mrf.mxu0
        %v731 = vadd.f32 0.0, %v730
        %v732 = vpop.f32.mrf.mxu0
        %v733 = vadd.f32 0.0, %v732
        %734 = vmatmul.bf16.gmra.mxu0 %v313
        %v735 = vpop.f32.mrf.mxu0
        %v736 = vadd.f32 0.0, %v735
        %v737 = vpop.f32.mrf.mxu0
        %v738 = vadd.f32 0.0, %v737
        %739 = vmatmul.bf16.gmra.mxu0 %v314
        %v740 = vpop.f32.mrf.mxu0
        %v741 = vadd.f32 0.0, %v740
        %v742 = vpop.f32.mrf.mxu0
        %v743 = vadd.f32 0.0, %v742
        %744 = vmatmul.bf16.gmra.mxu0 %v315
        %v745 = vpop.f32.mrf.mxu0
        %v746 = vadd.f32 0.0, %v745
        %v747 = vpop.f32.mrf.mxu0
        %v748 = vadd.f32 0.0, %v747
        %749 = vdwg.mxu0
        %v750 = vld [vmem:[%s2] sm:$0x3]
        %v752 = vperm.slane %v750, 0
        %v753 = vperm.slane %v750, 1
        %v756 = vmul.f32 %v422, %v752
        %v757 = vmul.f32 %v591, %v753
        %v758 = vmul.f32 %v424, %v752
        %v759 = vmul.f32 %v593, %v753
        %v760 = vmul.f32 %v427, %v752
        %v761 = vmul.f32 %v596, %v753
        %v762 = vmul.f32 %v429, %v752
        %v763 = vmul.f32 %v598, %v753
        %v764 = vmul.f32 %v432, %v752
        %v765 = vmul.f32 %v601, %v753
        %v766 = vmul.f32 %v434, %v752
        %v767 = vmul.f32 %v603, %v753
        %v768 = vmul.f32 %v437, %v752
        %v769 = vmul.f32 %v606, %v753
        %v770 = vmul.f32 %v439, %v752
        %v771 = vmul.f32 %v608, %v753
        %v772 = vmul.f32 %v442, %v752
        %v773 = vmul.f32 %v611, %v753
        %v774 = vmul.f32 %v444, %v752
        %v775 = vmul.f32 %v613, %v753
        %v776 = vmul.f32 %v447, %v752
        %v777 = vmul.f32 %v616, %v753
        %v778 = vmul.f32 %v449, %v752
        %v779 = vmul.f32 %v618, %v753
        %v780 = vmul.f32 %v452, %v752
        %v781 = vmul.f32 %v621, %v753
        %v782 = vmul.f32 %v454, %v752
        %v783 = vmul.f32 %v623, %v753
        %v784 = vmul.f32 %v457, %v752
        %v785 = vmul.f32 %v626, %v753
        %v786 = vmul.f32 %v459, %v752
        %v787 = vmul.f32 %v628, %v753
        %v788 = vmul.f32 %v462, %v752
        %v789 = vmul.f32 %v631, %v753
        %v790 = vmul.f32 %v464, %v752
        %v791 = vmul.f32 %v633, %v753
        %v792 = vmul.f32 %v467, %v752
        %v793 = vmul.f32 %v636, %v753
        %v794 = vmul.f32 %v469, %v752
        %v795 = vmul.f32 %v638, %v753
        %v796 = vmul.f32 %v472, %v752
        %v797 = vmul.f32 %v641, %v753
        %v798 = vmul.f32 %v474, %v752
        %v799 = vmul.f32 %v643, %v753
        %v800 = vmul.f32 %v477, %v752
        %v801 = vmul.f32 %v646, %v753
        %v802 = vmul.f32 %v479, %v752
        %v803 = vmul.f32 %v648, %v753
        %v804 = vmul.f32 %v482, %v752
        %v805 = vmul.f32 %v651, %v753
        %v806 = vmul.f32 %v484, %v752
        %v807 = vmul.f32 %v653, %v753
        %v808 = vmul.f32 %v487, %v752
        %v809 = vmul.f32 %v656, %v753
        %v810 = vmul.f32 %v489, %v752
        %v811 = vmul.f32 %v658, %v753
        %v812 = vmul.f32 %v492, %v752
        %v813 = vmul.f32 %v661, %v753
        %v814 = vmul.f32 %v494, %v752
        %v815 = vmul.f32 %v663, %v753
        %v816 = vmul.f32 %v497, %v752
        %v817 = vmul.f32 %v666, %v753
        %v818 = vmul.f32 %v499, %v752
        %v819 = vmul.f32 %v668, %v753
        %v820 = vmul.f32 %v502, %v752
        %v821 = vmul.f32 %v671, %v753
        %v822 = vmul.f32 %v504, %v752
        %v823 = vmul.f32 %v673, %v753
        %v824 = vmul.f32 %v507, %v752
        %v825 = vmul.f32 %v676, %v753
        %v826 = vmul.f32 %v509, %v752
        %v827 = vmul.f32 %v678, %v753
        %v828 = vmul.f32 %v512, %v752
        %v829 = vmul.f32 %v681, %v753
        %v830 = vmul.f32 %v514, %v752
        %v831 = vmul.f32 %v683, %v753
        %v832 = vmul.f32 %v517, %v752
        %v833 = vmul.f32 %v686, %v753
        %v834 = vmul.f32 %v519, %v752
        %v835 = vmul.f32 %v688, %v753
        %v836 = vmul.f32 %v522, %v752
        %v837 = vmul.f32 %v691, %v753
        %v838 = vmul.f32 %v524, %v752
        %v839 = vmul.f32 %v693, %v753
        %v840 = vmul.f32 %v527, %v752
        %v841 = vmul.f32 %v696, %v753
        %v842 = vmul.f32 %v529, %v752
        %v843 = vmul.f32 %v698, %v753
        %v844 = vmul.f32 %v532, %v752
        %v845 = vmul.f32 %v701, %v753
        %v846 = vmul.f32 %v534, %v752
        %v847 = vmul.f32 %v703, %v753
        %v848 = vmul.f32 %v537, %v752
        %v849 = vmul.f32 %v706, %v753
        %v850 = vmul.f32 %v539, %v752
        %v851 = vmul.f32 %v708, %v753
        %v852 = vmul.f32 %v542, %v752
        %v853 = vmul.f32 %v711, %v753
        %v854 = vmul.f32 %v544, %v752
        %v855 = vmul.f32 %v713, %v753
        %v856 = vmul.f32 %v547, %v752
        %v857 = vmul.f32 %v716, %v753
        %v858 = vmul.f32 %v549, %v752
        %v859 = vmul.f32 %v718, %v753
        %v860 = vmul.f32 %v552, %v752
        %v861 = vmul.f32 %v721, %v753
        %v862 = vmul.f32 %v554, %v752
        %v863 = vmul.f32 %v723, %v753
        %v864 = vmul.f32 %v557, %v752
        %v865 = vmul.f32 %v726, %v753
        %v866 = vmul.f32 %v559, %v752
        %v867 = vmul.f32 %v728, %v753
        %v868 = vmul.f32 %v562, %v752
        %v869 = vmul.f32 %v731, %v753
        %v870 = vmul.f32 %v564, %v752
        %v871 = vmul.f32 %v733, %v753
        %v872 = vmul.f32 %v567, %v752
        %v873 = vmul.f32 %v736, %v753
        %v874 = vmul.f32 %v569, %v752
        %v875 = vmul.f32 %v738, %v753
        %v876 = vmul.f32 %v572, %v752
        %v877 = vmul.f32 %v741, %v753
        %v878 = vmul.f32 %v574, %v752
        %v879 = vmul.f32 %v743, %v753
        %v880 = vmul.f32 %v577, %v752
        %v881 = vmul.f32 %v746, %v753
        %v882 = vmul.f32 %v579, %v752
        %v883 = vmul.f32 %v748, %v753
        %v884 = vld [vmem:[%s3] sm:$0x3]
        %v886 = vperm.slane %v884, 0
        %v887 = vperm.slane %v884, 1
        %v890 = vadd.f32 %v756, %v886
        %v891 = vadd.f32 %v757, %v887
        %v892 = vadd.f32 %v758, %v886
        %v893 = vadd.f32 %v759, %v887
        %v894 = vadd.f32 %v760, %v886
        %v895 = vadd.f32 %v761, %v887
        %v896 = vadd.f32 %v762, %v886
        %v897 = vadd.f32 %v763, %v887
        %v898 = vadd.f32 %v764, %v886
        %v899 = vadd.f32 %v765, %v887
        %v900 = vadd.f32 %v766, %v886
        %v901 = vadd.f32 %v767, %v887
        %v902 = vadd.f32 %v768, %v886
        %v903 = vadd.f32 %v769, %v887
        %v904 = vadd.f32 %v770, %v886
        %v905 = vadd.f32 %v771, %v887
        %v906 = vadd.f32 %v772, %v886
        %v907 = vadd.f32 %v773, %v887
        %v908 = vadd.f32 %v774, %v886
        %v909 = vadd.f32 %v775, %v887
        %v910 = vadd.f32 %v776, %v886
        %v911 = vadd.f32 %v777, %v887
        %v912 = vadd.f32 %v778, %v886
        %v913 = vadd.f32 %v779, %v887
        %v914 = vadd.f32 %v780, %v886
        %v915 = vadd.f32 %v781, %v887
        %v916 = vadd.f32 %v782, %v886
        %v917 = vadd.f32 %v783, %v887
        %v918 = vadd.f32 %v784, %v886
        %v919 = vadd.f32 %v785, %v887
        %v920 = vadd.f32 %v786, %v886
        %v921 = vadd.f32 %v787, %v887
        %v922 = vadd.f32 %v788, %v886
        %v923 = vadd.f32 %v789, %v887
        %v924 = vadd.f32 %v790, %v886
        %v925 = vadd.f32 %v791, %v887
        %v926 = vadd.f32 %v792, %v886
        %v927 = vadd.f32 %v793, %v887
        %v928 = vadd.f32 %v794, %v886
        %v929 = vadd.f32 %v795, %v887
        %v930 = vadd.f32 %v796, %v886
        %v931 = vadd.f32 %v797, %v887
        %v932 = vadd.f32 %v798, %v886
        %v933 = vadd.f32 %v799, %v887
        %v934 = vadd.f32 %v800, %v886
        %v935 = vadd.f32 %v801, %v887
        %v936 = vadd.f32 %v802, %v886
        %v937 = vadd.f32 %v803, %v887
        %v938 = vadd.f32 %v804, %v886
        %v939 = vadd.f32 %v805, %v887
        %v940 = vadd.f32 %v806, %v886
        %v941 = vadd.f32 %v807, %v887
        %v942 = vadd.f32 %v808, %v886
        %v943 = vadd.f32 %v809, %v887
        %v944 = vadd.f32 %v810, %v886
        %v945 = vadd.f32 %v811, %v887
        %v946 = vadd.f32 %v812, %v886
        %v947 = vadd.f32 %v813, %v887
        %v948 = vadd.f32 %v814, %v886
        %v949 = vadd.f32 %v815, %v887
        %v950 = vadd.f32 %v816, %v886
        %v951 = vadd.f32 %v817, %v887
        %v952 = vadd.f32 %v818, %v886
        %v953 = vadd.f32 %v819, %v887
        %v954 = vadd.f32 %v820, %v886
        %v955 = vadd.f32 %v821, %v887
        %v956 = vadd.f32 %v822, %v886
        %v957 = vadd.f32 %v823, %v887
        %v958 = vadd.f32 %v824, %v886
        %v959 = vadd.f32 %v825, %v887
        %v960 = vadd.f32 %v826, %v886
        %v961 = vadd.f32 %v827, %v887
        %v962 = vadd.f32 %v828, %v886
        %v963 = vadd.f32 %v829, %v887
        %v964 = vadd.f32 %v830, %v886
        %v965 = vadd.f32 %v831, %v887
        %v966 = vadd.f32 %v832, %v886
        %v967 = vadd.f32 %v833, %v887
        %v968 = vadd.f32 %v834, %v886
        %v969 = vadd.f32 %v835, %v887
        %v970 = vadd.f32 %v836, %v886
        %v971 = vadd.f32 %v837, %v887
        %v972 = vadd.f32 %v838, %v886
        %v973 = vadd.f32 %v839, %v887
        %v974 = vadd.f32 %v840, %v886
        %v975 = vadd.f32 %v841, %v887
        %v976 = vadd.f32 %v842, %v886
        %v977 = vadd.f32 %v843, %v887
        %v978 = vadd.f32 %v844, %v886
        %v979 = vadd.f32 %v845, %v887
        %v980 = vadd.f32 %v846, %v886
        %v981 = vadd.f32 %v847, %v887
        %v982 = vadd.f32 %v848, %v886
        %v983 = vadd.f32 %v849, %v887
        %v984 = vadd.f32 %v850, %v886
        %v985 = vadd.f32 %v851, %v887
        %v986 = vadd.f32 %v852, %v886
        %v987 = vadd.f32 %v853, %v887
        %v988 = vadd.f32 %v854, %v886
        %v989 = vadd.f32 %v855, %v887
        %v990 = vadd.f32 %v856, %v886
        %v991 = vadd.f32 %v857, %v887
        %v992 = vadd.f32 %v858, %v886
        %v993 = vadd.f32 %v859, %v887
        %v994 = vadd.f32 %v860, %v886
        %v995 = vadd.f32 %v861, %v887
        %v996 = vadd.f32 %v862, %v886
        %v997 = vadd.f32 %v863, %v887
        %v998 = vadd.f32 %v864, %v886
        %v999 = vadd.f32 %v865, %v887
        %v1000 = vadd.f32 %v866, %v886
        %v1001 = vadd.f32 %v867, %v887
        %v1002 = vadd.f32 %v868, %v886
        %v1003 = vadd.f32 %v869, %v887
        %v1004 = vadd.f32 %v870, %v886
        %v1005 = vadd.f32 %v871, %v887
        %v1006 = vadd.f32 %v872, %v886
        %v1007 = vadd.f32 %v873, %v887
        %v1008 = vadd.f32 %v874, %v886
        %v1009 = vadd.f32 %v875, %v887
        %v1010 = vadd.f32 %v876, %v886
        %v1011 = vadd.f32 %v877, %v887
        %v1012 = vadd.f32 %v878, %v886
        %v1013 = vadd.f32 %v879, %v887
        %v1014 = vadd.f32 %v880, %v886
        %v1015 = vadd.f32 %v881, %v887
        %v1016 = vadd.f32 %v882, %v886
        %v1017 = vadd.f32 %v883, %v887
        %v1018 = vmax.f32 %v890, 0.0
        %v1019 = vmax.f32 %v891, 0.0
        %v1020 = vmax.f32 %v892, 0.0
        %v1021 = vmax.f32 %v893, 0.0
        %v1022 = vmax.f32 %v894, 0.0
        %v1023 = vmax.f32 %v895, 0.0
        %v1024 = vmax.f32 %v896, 0.0
        %v1025 = vmax.f32 %v897, 0.0
        %v1026 = vmax.f32 %v898, 0.0
        %v1027 = vmax.f32 %v899, 0.0
        %v1028 = vmax.f32 %v900, 0.0
        %v1029 = vmax.f32 %v901, 0.0
        %v1030 = vmax.f32 %v902, 0.0
        %v1031 = vmax.f32 %v903, 0.0
        %v1032 = vmax.f32 %v904, 0.0
        %v1033 = vmax.f32 %v905, 0.0
        %v1034 = vmax.f32 %v906, 0.0
        %v1035 = vmax.f32 %v907, 0.0
        %v1036 = vmax.f32 %v908, 0.0
        %v1037 = vmax.f32 %v909, 0.0
        %v1038 = vmax.f32 %v910, 0.0
        %v1039 = vmax.f32 %v911, 0.0
        %v1040 = vmax.f32 %v912, 0.0
        %v1041 = vmax.f32 %v913, 0.0
        %v1042 = vmax.f32 %v914, 0.0
        %v1043 = vmax.f32 %v915, 0.0
        %v1044 = vmax.f32 %v916, 0.0
        %v1045 = vmax.f32 %v917, 0.0
        %v1046 = vmax.f32 %v918, 0.0
        %v1047 = vmax.f32 %v919, 0.0
        %v1048 = vmax.f32 %v920, 0.0
        %v1049 = vmax.f32 %v921, 0.0
        %v1050 = vmax.f32 %v922, 0.0
        %v1051 = vmax.f32 %v923, 0.0
        %v1052 = vmax.f32 %v924, 0.0
        %v1053 = vmax.f32 %v925, 0.0
        %v1054 = vmax.f32 %v926, 0.0
        %v1055 = vmax.f32 %v927, 0.0
        %v1056 = vmax.f32 %v928, 0.0
        %v1057 = vmax.f32 %v929, 0.0
        %v1058 = vmax.f32 %v930, 0.0
        %v1059 = vmax.f32 %v931, 0.0
        %v1060 = vmax.f32 %v932, 0.0
        %v1061 = vmax.f32 %v933, 0.0
        %v1062 = vmax.f32 %v934, 0.0
        %v1063 = vmax.f32 %v935, 0.0
        %v1064 = vmax.f32 %v936, 0.0
        %v1065 = vmax.f32 %v937, 0.0
        %v1066 = vmax.f32 %v938, 0.0
        %v1067 = vmax.f32 %v939, 0.0
        %v1068 = vmax.f32 %v940, 0.0
        %v1069 = vmax.f32 %v941, 0.0
        %v1070 = vmax.f32 %v942, 0.0
        %v1071 = vmax.f32 %v943, 0.0
        %v1072 = vmax.f32 %v944, 0.0
        %v1073 = vmax.f32 %v945, 0.0
        %v1074 = vmax.f32 %v946, 0.0
        %v1075 = vmax.f32 %v947, 0.0
        %v1076 = vmax.f32 %v948, 0.0
        %v1077 = vmax.f32 %v949, 0.0
        %v1078 = vmax.f32 %v950, 0.0
        %v1079 = vmax.f32 %v951, 0.0
        %v1080 = vmax.f32 %v952, 0.0
        %v1081 = vmax.f32 %v953, 0.0
        %v1082 = vmax.f32 %v954, 0.0
        %v1083 = vmax.f32 %v955, 0.0
        %v1084 = vmax.f32 %v956, 0.0
        %v1085 = vmax.f32 %v957, 0.0
        %v1086 = vmax.f32 %v958, 0.0
        %v1087 = vmax.f32 %v959, 0.0
        %v1088 = vmax.f32 %v960, 0.0
        %v1089 = vmax.f32 %v961, 0.0
        %v1090 = vmax.f32 %v962, 0.0
        %v1091 = vmax.f32 %v963, 0.0
        %v1092 = vmax.f32 %v964, 0.0
        %v1093 = vmax.f32 %v965, 0.0
        %v1094 = vmax.f32 %v966, 0.0
        %v1095 = vmax.f32 %v967, 0.0
        %v1096 = vmax.f32 %v968, 0.0
        %v1097 = vmax.f32 %v969, 0.0
        %v1098 = vmax.f32 %v970, 0.0
        %v1099 = vmax.f32 %v971, 0.0
        %v1100 = vmax.f32 %v972, 0.0
        %v1101 = vmax.f32 %v973, 0.0
        %v1102 = vmax.f32 %v974, 0.0
        %v1103 = vmax.f32 %v975, 0.0
        %v1104 = vmax.f32 %v976, 0.0
        %v1105 = vmax.f32 %v977, 0.0
        %v1106 = vmax.f32 %v978, 0.0
        %v1107 = vmax.f32 %v979, 0.0
        %v1108 = vmax.f32 %v980, 0.0
        %v1109 = vmax.f32 %v981, 0.0
        %v1110 = vmax.f32 %v982, 0.0
        %v1111 = vmax.f32 %v983, 0.0
        %v1112 = vmax.f32 %v984, 0.0
        %v1113 = vmax.f32 %v985, 0.0
        %v1114 = vmax.f32 %v986, 0.0
        %v1115 = vmax.f32 %v987, 0.0
        %v1116 = vmax.f32 %v988, 0.0
        %v1117 = vmax.f32 %v989, 0.0
        %v1118 = vmax.f32 %v990, 0.0
        %v1119 = vmax.f32 %v991, 0.0
        %v1120 = vmax.f32 %v992, 0.0
        %v1121 = vmax.f32 %v993, 0.0
        %v1122 = vmax.f32 %v994, 0.0
        %v1123 = vmax.f32 %v995, 0.0
        %v1124 = vmax.f32 %v996, 0.0
        %v1125 = vmax.f32 %v997, 0.0
        %v1126 = vmax.f32 %v998, 0.0
        %v1127 = vmax.f32 %v999, 0.0
        %v1128 = vmax.f32 %v1000, 0.0
        %v1129 = vmax.f32 %v1001, 0.0
        %v1130 = vmax.f32 %v1002, 0.0
        %v1131 = vmax.f32 %v1003, 0.0
        %v1132 = vmax.f32 %v1004, 0.0
        %v1133 = vmax.f32 %v1005, 0.0
        %v1134 = vmax.f32 %v1006, 0.0
        %v1135 = vmax.f32 %v1007, 0.0
        %v1136 = vmax.f32 %v1008, 0.0
        %v1137 = vmax.f32 %v1009, 0.0
        %v1138 = vmax.f32 %v1010, 0.0
        %v1139 = vmax.f32 %v1011, 0.0
        %v1140 = vmax.f32 %v1012, 0.0
        %v1141 = vmax.f32 %v1013, 0.0
        %v1142 = vmax.f32 %v1014, 0.0
        %v1143 = vmax.f32 %v1015, 0.0
        %v1144 = vmax.f32 %v1016, 0.0
        %v1145 = vmax.f32 %v1017, 0.0
        %v1146 = vpack.c.bf16 %v1019, %v1018
        %v1147 = vpack.c.bf16 %v1021, %v1020
        %v1148 = vpack.c.bf16 %v1023, %v1022
        %v1149 = vpack.c.bf16 %v1025, %v1024
        %v1150 = vpack.c.bf16 %v1027, %v1026
        %v1151 = vpack.c.bf16 %v1029, %v1028
        %v1152 = vpack.c.bf16 %v1031, %v1030
        %v1153 = vpack.c.bf16 %v1033, %v1032
        %v1154 = vpack.c.bf16 %v1035, %v1034
        %v1155 = vpack.c.bf16 %v1037, %v1036
        %v1156 = vpack.c.bf16 %v1039, %v1038
        %v1157 = vpack.c.bf16 %v1041, %v1040
        %v1158 = vpack.c.bf16 %v1043, %v1042
        %v1159 = vpack.c.bf16 %v1045, %v1044
        %v1160 = vpack.c.bf16 %v1047, %v1046
        %v1161 = vpack.c.bf16 %v1049, %v1048
        %v1162 = vpack.c.bf16 %v1051, %v1050
        %v1163 = vpack.c.bf16 %v1053, %v1052
        %v1164 = vpack.c.bf16 %v1055, %v1054
        %v1165 = vpack.c.bf16 %v1057, %v1056
        %v1166 = vpack.c.bf16 %v1059, %v1058
        %v1167 = vpack.c.bf16 %v1061, %v1060
        %v1168 = vpack.c.bf16 %v1063, %v1062
        %v1169 = vpack.c.bf16 %v1065, %v1064
        %v1170 = vpack.c.bf16 %v1067, %v1066
        %v1171 = vpack.c.bf16 %v1069, %v1068
        %v1172 = vpack.c.bf16 %v1071, %v1070
        %v1173 = vpack.c.bf16 %v1073, %v1072
        %v1174 = vpack.c.bf16 %v1075, %v1074
        %v1175 = vpack.c.bf16 %v1077, %v1076
        %v1176 = vpack.c.bf16 %v1079, %v1078
        %v1177 = vpack.c.bf16 %v1081, %v1080
        %v1178 = vpack.c.bf16 %v1083, %v1082
        %v1179 = vpack.c.bf16 %v1085, %v1084
        %v1180 = vpack.c.bf16 %v1087, %v1086
        %v1181 = vpack.c.bf16 %v1089, %v1088
        %v1182 = vpack.c.bf16 %v1091, %v1090
        %v1183 = vpack.c.bf16 %v1093, %v1092
        %v1184 = vpack.c.bf16 %v1095, %v1094
        %v1185 = vpack.c.bf16 %v1097, %v1096
        %v1186 = vpack.c.bf16 %v1099, %v1098
        %v1187 = vpack.c.bf16 %v1101, %v1100
        %v1188 = vpack.c.bf16 %v1103, %v1102
        %v1189 = vpack.c.bf16 %v1105, %v1104
        %v1190 = vpack.c.bf16 %v1107, %v1106
        %v1191 = vpack.c.bf16 %v1109, %v1108
        %v1192 = vpack.c.bf16 %v1111, %v1110
        %v1193 = vpack.c.bf16 %v1113, %v1112
        %v1194 = vpack.c.bf16 %v1115, %v1114
        %v1195 = vpack.c.bf16 %v1117, %v1116
        %v1196 = vpack.c.bf16 %v1119, %v1118
        %v1197 = vpack.c.bf16 %v1121, %v1120
        %v1198 = vpack.c.bf16 %v1123, %v1122
        %v1199 = vpack.c.bf16 %v1125, %v1124
        %v1200 = vpack.c.bf16 %v1127, %v1126
        %v1201 = vpack.c.bf16 %v1129, %v1128
        %v1202 = vpack.c.bf16 %v1131, %v1130
        %v1203 = vpack.c.bf16 %v1133, %v1132
        %v1204 = vpack.c.bf16 %v1135, %v1134
        %v1205 = vpack.c.bf16 %v1137, %v1136
        %v1206 = vpack.c.bf16 %v1139, %v1138
        %v1207 = vpack.c.bf16 %v1141, %v1140
        %v1208 = vpack.c.bf16 %v1143, %v1142
        %v1209 = vpack.c.bf16 %v1145, %v1144
        %1210 = vst [vmem:[%s199] sm:$0xff] %v1146
        %1211 = vst [vmem:[%s199 + $0x8] sm:$0xff] %v1147
        %1212 = vst [vmem:[%s199 + $0x10] sm:$0xff] %v1148
        %1213 = vst [vmem:[%s199 + $0x18] sm:$0xff] %v1149
        %1214 = vst [vmem:[%s199 + $0x20] sm:$0xff] %v1150
        %1215 = vst [vmem:[%s199 + $0x28] sm:$0xff] %v1151
        %1216 = vst [vmem:[%s199 + $0x30] sm:$0xff] %v1152
        %1217 = vst [vmem:[%s199 + $0x38] sm:$0xff] %v1153
        %1218 = vst [vmem:[%s199 + $0x40] sm:$0xff] %v1154
        %1219 = vst [vmem:[%s199 + $0x48] sm:$0xff] %v1155
        %1220 = vst [vmem:[%s199 + $0x50] sm:$0xff] %v1156
        %1221 = vst [vmem:[%s199 + $0x58] sm:$0xff] %v1157
        %1222 = vst [vmem:[%s199 + $0x60] sm:$0xff] %v1158
        %1223 = vst [vmem:[%s199 + $0x68] sm:$0xff] %v1159
        %1224 = vst [vmem:[%s199 + $0x70] sm:$0xff] %v1160
        %1225 = vst [vmem:[%s199 + $0x78] sm:$0xff] %v1161
        %1226 = vst [vmem:[%s199 + $0x80] sm:$0xff] %v1162
        %1227 = vst [vmem:[%s199 + $0x88] sm:$0xff] %v1163
        %1228 = vst [vmem:[%s199 + $0x90] sm:$0xff] %v1164
        %1229 = vst [vmem:[%s199 + $0x98] sm:$0xff] %v1165
        %1230 = vst [vmem:[%s199 + $0xa0] sm:$0xff] %v1166
        %1231 = vst [vmem:[%s199 + $0xa8] sm:$0xff] %v1167
        %1232 = vst [vmem:[%s199 + $0xb0] sm:$0xff] %v1168
        %1233 = vst [vmem:[%s199 + $0xb8] sm:$0xff] %v1169
        %1234 = vst [vmem:[%s199 + $0xc0] sm:$0xff] %v1170
        %1235 = vst [vmem:[%s199 + $0xc8] sm:$0xff] %v1171
        %1236 = vst [vmem:[%s199 + $0xd0] sm:$0xff] %v1172
        %1237 = vst [vmem:[%s199 + $0xd8] sm:$0xff] %v1173
        %1238 = vst [vmem:[%s199 + $0xe0] sm:$0xff] %v1174
        %1239 = vst [vmem:[%s199 + $0xe8] sm:$0xff] %v1175
        %1240 = vst [vmem:[%s199 + $0xf0] sm:$0xff] %v1176
        %1241 = vst [vmem:[%s199 + $0xf8] sm:$0xff] %v1177
        %1242 = vst [vmem:[%s199 + $0x100] sm:$0xff] %v1178
        %1243 = vst [vmem:[%s199 + $0x108] sm:$0xff] %v1179
        %1244 = vst [vmem:[%s199 + $0x110] sm:$0xff] %v1180
        %1245 = vst [vmem:[%s199 + $0x118] sm:$0xff] %v1181
        %1246 = vst [vmem:[%s199 + $0x120] sm:$0xff] %v1182
        %1247 = vst [vmem:[%s199 + $0x128] sm:$0xff] %v1183
        %1248 = vst [vmem:[%s199 + $0x130] sm:$0xff] %v1184
        %1249 = vst [vmem:[%s199 + $0x138] sm:$0xff] %v1185
        %1250 = vst [vmem:[%s199 + $0x140] sm:$0xff] %v1186
        %1251 = vst [vmem:[%s199 + $0x148] sm:$0xff] %v1187
        %1252 = vst [vmem:[%s199 + $0x150] sm:$0xff] %v1188
        %1253 = vst [vmem:[%s199 + $0x158] sm:$0xff] %v1189
        %1254 = vst [vmem:[%s199 + $0x160] sm:$0xff] %v1190
        %1255 = vst [vmem:[%s199 + $0x168] sm:$0xff] %v1191
        %1256 = vst [vmem:[%s199 + $0x170] sm:$0xff] %v1192
        %1257 = vst [vmem:[%s199 + $0x178] sm:$0xff] %v1193
        %1258 = vst [vmem:[%s199 + $0x180] sm:$0xff] %v1194
        %1259 = vst [vmem:[%s199 + $0x188] sm:$0xff] %v1195
        %1260 = vst [vmem:[%s199 + $0x190] sm:$0xff] %v1196
        %1261 = vst [vmem:[%s199 + $0x198] sm:$0xff] %v1197
        %1262 = vst [vmem:[%s199 + $0x1a0] sm:$0xff] %v1198
        %1263 = vst [vmem:[%s199 + $0x1a8] sm:$0xff] %v1199
        %1264 = vst [vmem:[%s199 + $0x1b0] sm:$0xff] %v1200
        %1265 = vst [vmem:[%s199 + $0x1b8] sm:$0xff] %v1201
        %1266 = vst [vmem:[%s199 + $0x1c0] sm:$0xff] %v1202
        %1267 = vst [vmem:[%s199 + $0x1c8] sm:$0xff] %v1203
        %1268 = vst [vmem:[%s199 + $0x1d0] sm:$0xff] %v1204
        %1269 = vst [vmem:[%s199 + $0x1d8] sm:$0xff] %v1205
        %1270 = vst [vmem:[%s199 + $0x1e0] sm:$0xff] %v1206
        %1271 = vst [vmem:[%s199 + $0x1e8] sm:$0xff] %v1207
        %1272 = vst [vmem:[%s199 + $0x1f0] sm:$0xff] %v1208
        %1273 = vst [vmem:[%s199 + $0x1f8] sm:$0xff] %v1209
        %s1274 = sand.u32 %s112, 1
        %s1275 = sand.u32 %s112, 1
        %s1276 = smul.addr %s1275, 512
        %s1277 = scalar_lea.vmem [#allocation2], %s1276
        // Predicated region
        $region37: #{_lambda_.1} parent=35 // pred_check
          %p1278 = pneg %p122
        $region38: #{_lambda_.1} parent=35 // pred_check_branch
          %1280 = sbr.rel (%p1278) target = $region40
        $region39: #{_lambda_.1} parent=35 // pred_region
          %s1281 = smul.u32 64, %s15
          %s1282 = ssub.s32 65, %s1281
          %p1283 = scmp.lt.s32.totalorder %s1282, 64
          %s1284 = scalar_select %p1283, %s1282, 64
          %s1285 = smul.u32 4, %s1284
          %s1286 = smul.u32 %s1285, 2
          %p1287 = scmp.ne.s32.totalorder 0, %s1286
          %s1288 = smul.addr %s1281, 2
          %s1289 = smul.addr %s1288, 4
          %s1290 = scalar_lea.vmem %s4, %s1289
          // Predicated region
          $region41: #{_lambda_.1} parent=39 // pred_check
            %p1291 = pneg %p1287
          $region42: #{_lambda_.1} parent=39 // pred_check_branch
            %1293 = sbr.rel (%p1291) target = $region44
          $region43: #{_lambda_.1} parent=39 // pred_region
            // Predicated region
            $region45: #{_lambda_.1} parent=43 // pred_check
              _
            $region46: #{_lambda_.1} parent=43 // pred_check_branch
              %1295 = sbr.rel (0) target = $region48
            $region47: #{_lambda_.1} parent=43 // pred_region
              // Predicated region
              $region67: #{_lambda_.1} parent=47 // pred_check
                _
              $region68: #{_lambda_.1} parent=47 // pred_check_branch
                %1407 = sbr.rel (0) target = $region70
              $region69: #{_lambda_.1} parent=47 // pred_region
                %s1408 = sshrl.u32 %s1284, 5
                // While loop
                $region71: #{_lambda_.1} parent=69 // loop_pre_header
                  _
                $region72: #{_lambda_.1} parent=69 // loop_header
                  %s1410 = sphi 0, %s1412
                  %p1411 = scmp.ge.s32.totalorder %s1410, %s1408
                  %s1415 = sphi 0, %s1484
                  %s1416 = sphi %s1277, %s1487
                  %s1417 = sphi %s1290, %s1488
                $region73: #{_lambda_.1} parent=69 // loop_header_branch
                  %1414 = sbr.rel (%p1411) target = $region77
                $region74: #{_lambda_.1} parent=69 // loop_body
                  %v1418 = vld [vmem:[%s1416] sm:$0xff]
                  %1419 = vst [vmem:[%s1417] sm:$0xff] %v1418
                  %v1420 = vld [vmem:[%s1416 + $0x8] sm:$0xff]
                  %1421 = vst [vmem:[%s1417 + $0x8] sm:$0xff] %v1420
                  %v1422 = vld [vmem:[%s1416 + $0x10] sm:$0xff]
                  %1423 = vst [vmem:[%s1417 + $0x10] sm:$0xff] %v1422
                  %v1424 = vld [vmem:[%s1416 + $0x18] sm:$0xff]
                  %1425 = vst [vmem:[%s1417 + $0x18] sm:$0xff] %v1424
                  %v1426 = vld [vmem:[%s1416 + $0x20] sm:$0xff]
                  %1427 = vst [vmem:[%s1417 + $0x20] sm:$0xff] %v1426
                  %v1428 = vld [vmem:[%s1416 + $0x28] sm:$0xff]
                  %1429 = vst [vmem:[%s1417 + $0x28] sm:$0xff] %v1428
                  %v1430 = vld [vmem:[%s1416 + $0x30] sm:$0xff]
                  %1431 = vst [vmem:[%s1417 + $0x30] sm:$0xff] %v1430
                  %v1432 = vld [vmem:[%s1416 + $0x38] sm:$0xff]
                  %1433 = vst [vmem:[%s1417 + $0x38] sm:$0xff] %v1432
                  %v1434 = vld [vmem:[%s1416 + $0x40] sm:$0xff]
                  %1435 = vst [vmem:[%s1417 + $0x40] sm:$0xff] %v1434
                  %v1436 = vld [vmem:[%s1416 + $0x48] sm:$0xff]
                  %1437 = vst [vmem:[%s1417 + $0x48] sm:$0xff] %v1436
                  %v1438 = vld [vmem:[%s1416 + $0x50] sm:$0xff]
                  %1439 = vst [vmem:[%s1417 + $0x50] sm:$0xff] %v1438
                  %v1440 = vld [vmem:[%s1416 + $0x58] sm:$0xff]
                  %1441 = vst [vmem:[%s1417 + $0x58] sm:$0xff] %v1440
                  %v1442 = vld [vmem:[%s1416 + $0x60] sm:$0xff]
                  %1443 = vst [vmem:[%s1417 + $0x60] sm:$0xff] %v1442
                  %v1444 = vld [vmem:[%s1416 + $0x68] sm:$0xff]
                  %1445 = vst [vmem:[%s1417 + $0x68] sm:$0xff] %v1444
                  %v1446 = vld [vmem:[%s1416 + $0x70] sm:$0xff]
                  %1447 = vst [vmem:[%s1417 + $0x70] sm:$0xff] %v1446
                  %v1448 = vld [vmem:[%s1416 + $0x78] sm:$0xff]
                  %1449 = vst [vmem:[%s1417 + $0x78] sm:$0xff] %v1448
                  %v1450 = vld [vmem:[%s1416 + $0x80] sm:$0xff]
                  %1451 = vst [vmem:[%s1417 + $0x80] sm:$0xff] %v1450
                  %v1452 = vld [vmem:[%s1416 + $0x88] sm:$0xff]
                  %1453 = vst [vmem:[%s1417 + $0x88] sm:$0xff] %v1452
                  %v1454 = vld [vmem:[%s1416 + $0x90] sm:$0xff]
                  %1455 = vst [vmem:[%s1417 + $0x90] sm:$0xff] %v1454
                  %v1456 = vld [vmem:[%s1416 + $0x98] sm:$0xff]
                  %1457 = vst [vmem:[%s1417 + $0x98] sm:$0xff] %v1456
                  %v1458 = vld [vmem:[%s1416 + $0xa0] sm:$0xff]
                  %1459 = vst [vmem:[%s1417 + $0xa0] sm:$0xff] %v1458
                  %v1460 = vld [vmem:[%s1416 + $0xa8] sm:$0xff]
                  %1461 = vst [vmem:[%s1417 + $0xa8] sm:$0xff] %v1460
                  %v1462 = vld [vmem:[%s1416 + $0xb0] sm:$0xff]
                  %1463 = vst [vmem:[%s1417 + $0xb0] sm:$0xff] %v1462
                  %v1464 = vld [vmem:[%s1416 + $0xb8] sm:$0xff]
                  %1465 = vst [vmem:[%s1417 + $0xb8] sm:$0xff] %v1464
                  %v1466 = vld [vmem:[%s1416 + $0xc0] sm:$0xff]
                  %1467 = vst [vmem:[%s1417 + $0xc0] sm:$0xff] %v1466
                  %v1468 = vld [vmem:[%s1416 + $0xc8] sm:$0xff]
                  %1469 = vst [vmem:[%s1417 + $0xc8] sm:$0xff] %v1468
                  %v1470 = vld [vmem:[%s1416 + $0xd0] sm:$0xff]
                  %1471 = vst [vmem:[%s1417 + $0xd0] sm:$0xff] %v1470
                  %v1472 = vld [vmem:[%s1416 + $0xd8] sm:$0xff]
                  %1473 = vst [vmem:[%s1417 + $0xd8] sm:$0xff] %v1472
                  %v1474 = vld [vmem:[%s1416 + $0xe0] sm:$0xff]
                  %1475 = vst [vmem:[%s1417 + $0xe0] sm:$0xff] %v1474
                  %v1476 = vld [vmem:[%s1416 + $0xe8] sm:$0xff]
                  %1477 = vst [vmem:[%s1417 + $0xe8] sm:$0xff] %v1476
                  %v1478 = vld [vmem:[%s1416 + $0xf0] sm:$0xff]
                  %1479 = vst [vmem:[%s1417 + $0xf0] sm:$0xff] %v1478
                  %v1480 = vld [vmem:[%s1416 + $0xf8] sm:$0xff]
                  %1481 = vst [vmem:[%s1417 + $0xf8] sm:$0xff] %v1480
                  %s1482 = sadd.s32 1, %s1415
                  %p1483 = scmp.ge.s32.totalorder %s1482, %s1408
                  %s1484 = scalar_select %p1483, 0, %s1482
                  %s1485 = smul.u32 %s1484, 256
                  %s1486 = smul.u32 %s1484, 256
                  %s1487 = scalar_lea.vmem %s1277, %s1485 [#allocation2]
                  %s1488 = scalar_lea.vmem %s1290, %s1486
                $region75: #{_lambda_.1} parent=69 // loop_footer
                  %s1412 = sadd.s32 %s1410, 1
                $region76: #{_lambda_.1} parent=69 // loop_footer_branch
                  %1409 = sbr.rel target = $region72
                $region77: #{_lambda_.1} parent=69 // loop_exit
                  _
                %s1489 = sshrl.u32 %s1284, 5
                %s1490 = sand.u32 %s1284, 31
                %s1491 = smul.u32 %s1489, 32
                %s1492 = smul.u32 8, %s1491
                %s1493 = scalar_lea.vmem %s1277, %s1492 [#allocation2]
                %s1494 = smul.u32 8, %s1491
                %s1495 = scalar_lea.vmem %s1290, %s1494
                // While loop
                $region78: #{_lambda_.1} parent=69 // loop_pre_header
                  _
                $region79: #{_lambda_.1} parent=69 // loop_header
                  %s1497 = sphi 0, %s1499
                  %p1498 = scmp.ge.s32.totalorder %s1497, %s1490
                  %s1502 = sphi 0, %s1509
                  %s1503 = sphi %s1493, %s1512
                  %s1504 = sphi %s1495, %s1513
                $region80: #{_lambda_.1} parent=69 // loop_header_branch
                  %1501 = sbr.rel (%p1498) target = $region84
                $region81: #{_lambda_.1} parent=69 // loop_body
                  %v1505 = vld [vmem:[%s1503] sm:$0xff]
                  %1506 = vst [vmem:[%s1504] sm:$0xff] %v1505
                  %s1507 = sadd.s32 1, %s1502
                  %p1508 = scmp.ge.s32.totalorder %s1507, %s1490
                  %s1509 = scalar_select %p1508, 0, %s1507
                  %s1510 = smul.u32 %s1509, 8
                  %s1511 = smul.u32 %s1509, 8
                  %s1512 = scalar_lea.vmem %s1493, %s1510 [#allocation2]
                  %s1513 = scalar_lea.vmem %s1495, %s1511
                $region82: #{_lambda_.1} parent=69 // loop_footer
                  %s1499 = sadd.s32 %s1497, 1
                $region83: #{_lambda_.1} parent=69 // loop_footer_branch
                  %1496 = sbr.rel target = $region79
                $region84: #{_lambda_.1} parent=69 // loop_exit
                  _
              $region70: #{_lambda_.1} parent=47 // pred_fallthru
                _
              // Predicated region
              $region85: #{_lambda_.1} parent=47 // pred_check
                _
              $region86: #{_lambda_.1} parent=47 // pred_check_branch
                %1515 = sbr.rel target = $region88
              $region87: #{_lambda_.1} parent=47 // pred_region
                _
              $region88: #{_lambda_.1} parent=47 // pred_fallthru
                _
            $region48: #{_lambda_.1} parent=43 // pred_fallthru
              _
            // Predicated region
            $region49: #{_lambda_.1} parent=43 // pred_check
              _
            $region50: #{_lambda_.1} parent=43 // pred_check_branch
              %1297 = sbr.rel target = $region52
            $region51: #{_lambda_.1} parent=43 // pred_region
              %s1299 = ssub.s32 256, 1
              %s1300 = sshrl.u32 %s1284, 5
              // While loop
              $region53: #{_lambda_.1} parent=51 // loop_pre_header
                _
              $region54: #{_lambda_.1} parent=51 // loop_header
                %s1302 = sphi 0, %s1304
                %p1303 = scmp.ge.s32.totalorder %s1302, %s1300
                %s1307 = sphi 0, %s1376
                %s1308 = sphi %s1277, %s1379
                %s1309 = sphi %s1290, %s1380
              $region55: #{_lambda_.1} parent=51 // loop_header_branch
                %1306 = sbr.rel (%p1303) target = $region59
              $region56: #{_lambda_.1} parent=51 // loop_body
                %v1310 = vld [vmem:[%s1308] sm:%s1299]
                %1311 = vst [vmem:[%s1309] sm:%s1299] %v1310
                %v1312 = vld [vmem:[%s1308 + $0x8] sm:%s1299]
                %1313 = vst [vmem:[%s1309 + $0x8] sm:%s1299] %v1312
                %v1314 = vld [vmem:[%s1308 + $0x10] sm:%s1299]
                %1315 = vst [vmem:[%s1309 + $0x10] sm:%s1299] %v1314
                %v1316 = vld [vmem:[%s1308 + $0x18] sm:%s1299]
                %1317 = vst [vmem:[%s1309 + $0x18] sm:%s1299] %v1316
                %v1318 = vld [vmem:[%s1308 + $0x20] sm:%s1299]
                %1319 = vst [vmem:[%s1309 + $0x20] sm:%s1299] %v1318
                %v1320 = vld [vmem:[%s1308 + $0x28] sm:%s1299]
                %1321 = vst [vmem:[%s1309 + $0x28] sm:%s1299] %v1320
                %v1322 = vld [vmem:[%s1308 + $0x30] sm:%s1299]
                %1323 = vst [vmem:[%s1309 + $0x30] sm:%s1299] %v1322
                %v1324 = vld [vmem:[%s1308 + $0x38] sm:%s1299]
                %1325 = vst [vmem:[%s1309 + $0x38] sm:%s1299] %v1324
                %v1326 = vld [vmem:[%s1308 + $0x40] sm:%s1299]
                %1327 = vst [vmem:[%s1309 + $0x40] sm:%s1299] %v1326
                %v1328 = vld [vmem:[%s1308 + $0x48] sm:%s1299]
                %1329 = vst [vmem:[%s1309 + $0x48] sm:%s1299] %v1328
                %v1330 = vld [vmem:[%s1308 + $0x50] sm:%s1299]
                %1331 = vst [vmem:[%s1309 + $0x50] sm:%s1299] %v1330
                %v1332 = vld [vmem:[%s1308 + $0x58] sm:%s1299]
                %1333 = vst [vmem:[%s1309 + $0x58] sm:%s1299] %v1332
                %v1334 = vld [vmem:[%s1308 + $0x60] sm:%s1299]
                %1335 = vst [vmem:[%s1309 + $0x60] sm:%s1299] %v1334
                %v1336 = vld [vmem:[%s1308 + $0x68] sm:%s1299]
                %1337 = vst [vmem:[%s1309 + $0x68] sm:%s1299] %v1336
                %v1338 = vld [vmem:[%s1308 + $0x70] sm:%s1299]
                %1339 = vst [vmem:[%s1309 + $0x70] sm:%s1299] %v1338
                %v1340 = vld [vmem:[%s1308 + $0x78] sm:%s1299]
                %1341 = vst [vmem:[%s1309 + $0x78] sm:%s1299] %v1340
                %v1342 = vld [vmem:[%s1308 + $0x80] sm:%s1299]
                %1343 = vst [vmem:[%s1309 + $0x80] sm:%s1299] %v1342
                %v1344 = vld [vmem:[%s1308 + $0x88] sm:%s1299]
                %1345 = vst [vmem:[%s1309 + $0x88] sm:%s1299] %v1344
                %v1346 = vld [vmem:[%s1308 + $0x90] sm:%s1299]
                %1347 = vst [vmem:[%s1309 + $0x90] sm:%s1299] %v1346
                %v1348 = vld [vmem:[%s1308 + $0x98] sm:%s1299]
                %1349 = vst [vmem:[%s1309 + $0x98] sm:%s1299] %v1348
                %v1350 = vld [vmem:[%s1308 + $0xa0] sm:%s1299]
                %1351 = vst [vmem:[%s1309 + $0xa0] sm:%s1299] %v1350
                %v1352 = vld [vmem:[%s1308 + $0xa8] sm:%s1299]
                %1353 = vst [vmem:[%s1309 + $0xa8] sm:%s1299] %v1352
                %v1354 = vld [vmem:[%s1308 + $0xb0] sm:%s1299]
                %1355 = vst [vmem:[%s1309 + $0xb0] sm:%s1299] %v1354
                %v1356 = vld [vmem:[%s1308 + $0xb8] sm:%s1299]
                %1357 = vst [vmem:[%s1309 + $0xb8] sm:%s1299] %v1356
                %v1358 = vld [vmem:[%s1308 + $0xc0] sm:%s1299]
                %1359 = vst [vmem:[%s1309 + $0xc0] sm:%s1299] %v1358
                %v1360 = vld [vmem:[%s1308 + $0xc8] sm:%s1299]
                %1361 = vst [vmem:[%s1309 + $0xc8] sm:%s1299] %v1360
                %v1362 = vld [vmem:[%s1308 + $0xd0] sm:%s1299]
                %1363 = vst [vmem:[%s1309 + $0xd0] sm:%s1299] %v1362
                %v1364 = vld [vmem:[%s1308 + $0xd8] sm:%s1299]
                %1365 = vst [vmem:[%s1309 + $0xd8] sm:%s1299] %v1364
                %v1366 = vld [vmem:[%s1308 + $0xe0] sm:%s1299]
                %1367 = vst [vmem:[%s1309 + $0xe0] sm:%s1299] %v1366
                %v1368 = vld [vmem:[%s1308 + $0xe8] sm:%s1299]
                %1369 = vst [vmem:[%s1309 + $0xe8] sm:%s1299] %v1368
                %v1370 = vld [vmem:[%s1308 + $0xf0] sm:%s1299]
                %1371 = vst [vmem:[%s1309 + $0xf0] sm:%s1299] %v1370
                %v1372 = vld [vmem:[%s1308 + $0xf8] sm:%s1299]
                %1373 = vst [vmem:[%s1309 + $0xf8] sm:%s1299] %v1372
                %s1374 = sadd.s32 1, %s1307
                %p1375 = scmp.ge.s32.totalorder %s1374, %s1300
                %s1376 = scalar_select %p1375, 0, %s1374
                %s1377 = smul.u32 %s1376, 256
                %s1378 = smul.u32 %s1376, 256
                %s1379 = scalar_lea.vmem %s1277, %s1377 [#allocation2]
                %s1380 = scalar_lea.vmem %s1290, %s1378
              $region57: #{_lambda_.1} parent=51 // loop_footer
                %s1304 = sadd.s32 %s1302, 1
              $region58: #{_lambda_.1} parent=51 // loop_footer_branch
                %1301 = sbr.rel target = $region54
              $region59: #{_lambda_.1} parent=51 // loop_exit
                _
              %s1381 = sshrl.u32 %s1284, 5
              %s1382 = sand.u32 %s1284, 31
              %s1383 = smul.u32 %s1381, 32
              %s1384 = smul.u32 8, %s1383
              %s1385 = scalar_lea.vmem %s1277, %s1384 [#allocation2]
              %s1386 = smul.u32 8, %s1383
              %s1387 = scalar_lea.vmem %s1290, %s1386
              // While loop
              $region60: #{_lambda_.1} parent=51 // loop_pre_header
                _
              $region61: #{_lambda_.1} parent=51 // loop_header
                %s1389 = sphi 0, %s1391
                %p1390 = scmp.ge.s32.totalorder %s1389, %s1382
                %s1394 = sphi 0, %s1401
                %s1395 = sphi %s1385, %s1404
                %s1396 = sphi %s1387, %s1405
              $region62: #{_lambda_.1} parent=51 // loop_header_branch
                %1393 = sbr.rel (%p1390) target = $region66
              $region63: #{_lambda_.1} parent=51 // loop_body
                %v1397 = vld [vmem:[%s1395] sm:%s1299]
                %1398 = vst [vmem:[%s1396] sm:%s1299] %v1397
                %s1399 = sadd.s32 1, %s1394
                %p1400 = scmp.ge.s32.totalorder %s1399, %s1382
                %s1401 = scalar_select %p1400, 0, %s1399
                %s1402 = smul.u32 %s1401, 8
                %s1403 = smul.u32 %s1401, 8
                %s1404 = scalar_lea.vmem %s1385, %s1402 [#allocation2]
                %s1405 = scalar_lea.vmem %s1387, %s1403
              $region64: #{_lambda_.1} parent=51 // loop_footer
                %s1391 = sadd.s32 %s1389, 1
              $region65: #{_lambda_.1} parent=51 // loop_footer_branch
                %1388 = sbr.rel target = $region61
              $region66: #{_lambda_.1} parent=51 // loop_exit
                _
            $region52: #{_lambda_.1} parent=43 // pred_fallthru
              _
          $region44: #{_lambda_.1} parent=39 // pred_fallthru
            _
          %1516 = vnop
        $region40: #{_lambda_.1} parent=35 // pred_fallthru
          _
      $region36: #{_lambda_.1} parent=5 // pred_fallthru
        _
      %p1517 = scmp.le.s32.totalorder 2, %s10
      // Predicated region
      $region89: #{_lambda_.1} parent=5 // pred_check
        %p1518 = pneg %p1517
      $region90: #{_lambda_.1} parent=5 // pred_check_branch
        %1520 = sbr.rel (%p1518) target = $region92
      $region91: #{_lambda_.1} parent=5 // pred_region
        %s1521 = ssub.s32 %s10, 2
        // Predicated region
        $region93: #{_lambda_.1} parent=91 // pred_check
          %p1522 = pneg %p128
        $region94: #{_lambda_.1} parent=91 // pred_check_branch
          %1524 = sbr.rel (%p1522) target = $region96
        $region95: #{_lambda_.1} parent=91 // pred_region
          %s1525 = sand.u32 %s113, 1
          %s1526 = sand.u32 %s113, 1
          %s1527 = smul.addr %s1526, 512
          %s1528 = scalar_lea.vmem [#allocation2], %s1527
        $region96: #{_lambda_.1} parent=91 // pred_fallthru
          _
      $region92: #{_lambda_.1} parent=5 // pred_fallthru
        _
    $region6: #{_lambda_.1} parent=1 // loop_footer
      %s14 = sadd.s32 1, %s10
    $region7: #{_lambda_.1} parent=1 // loop_footer_branch
      %9 = sbr.rel target = $region3
    $region8: #{_lambda_.1} parent=1 // loop_exit
      _

</llo_original>
